<compile_context>
chip_gen: v7x
topology: tpu7x:2x2x1
jax: 0.10.0
libtpu: 0.0.40
codegen_flags: <defaults>
</compile_context>

<pallas_src>
import functools

import jax
import jax.numpy as jnp
from jax.experimental import pallas as pl
from jax.experimental.pallas import tpu as pltpu


def _round_up(n, m):
    return ((n + m - 1) // m) * m


# ---------------------------------------------------------------------------
# Pallas kernel: fused act fake-quant + bf16 integer-code matmul + per-channel
# dequant + bias + optional ReLU (+ optional per-tile activation min/max).
# ---------------------------------------------------------------------------
def _quant_matmul_kernel(scal_ref, x_ref, wc_ref, chan_ref, *out_refs,
                         apply_relu, emit_stats, oc_valid):
    # scal_ref (SMEM f32[4]): [inv_act_delta, act_lo(-zp), act_hi(qmax-zp), act_delta]
    inv_da = scal_ref[0]
    lo_a = scal_ref[1]
    hi_a = scal_ref[2]
    da = scal_ref[3]

    o_ref = out_refs[0]

    # Activation fake-quant as zero-point-centred integer codes:
    #   (clip(round(x/d)+zp, 0, qmax) - zp) * d  ==  d * clip(round(x*inv_d), -zp, qmax-zp)
    # Multiply by an exact precomputed reciprocal (VALU) instead of dividing (EUP).
    # Codes are integers in [-255, 255], hence exact in bf16.
    x = x_ref[...]
    xc = jnp.clip(jnp.round(x * inv_da), lo_a, hi_a).astype(jnp.bfloat16)

    # Weight codes (wc_ref) are precomputed once per call in the wrapper (weights are
    # static), so the K*OC round/clip work is NOT redone per row tile.  bf16 x bf16
    # hits the native MXU rate; accumulate in f32.
    acc = jnp.dot(xc, wc_ref[...], preferred_element_type=jnp.float32)

    # Epilogue: per-output-channel dequant scale (act_delta * w_delta[c]), folded-BN
    # bias, absorbed ReLU.  chan_ref row 0 = w_delta, row 1 = bias.
    scale = da * chan_ref[0:1, :]
    out = acc * scale + chan_ref[1:2, :]
    if apply_relu:
        out = jnp.maximum(out, 0.0)
    o_ref[...] = out.astype(o_ref.dtype)

    if emit_stats:
        # Per-tile min/max of the valid output channels so the next layer's activation
        # quantizer does not need another HBM pass over this activation.
        stat_ref = out_refs[1]
        v = out[:, :oc_valid]
        tmax = jnp.max(jnp.max(v, axis=0, keepdims=True), axis=1, keepdims=True)
        tmin = jnp.min(jnp.min(v, axis=0, keepdims=True), axis=1, keepdims=True)
        stat_ref[0:4, :] = jnp.broadcast_to(tmax, (4, 128))
        stat_ref[4:8, :] = jnp.broadcast_to(tmin, (4, 128))


def quant_matmul(x, w_codes, w_delta, bias, act_scalars, *, apply_relu=False,
                 emit_stats=False, row_tile=256):
    """Fused fake-quant matmul for one QuantModule.

    x:          [M, K]  f32 raw activations (fake-quantized in-kernel).
    w_codes:    [K, OC] bf16 zero-point-centred integer weight codes (precomputed).
    w_delta:    [OC]    f32 per-output-channel quant step.
    bias:       [OC]    f32 (BN folded).
    act_scalars: (delta, inv_delta, lo, hi) activation-quantizer scalars.
    Returns [M, OC] f32, plus (min, max) of the output if emit_stats.
    """
    M, K = x.shape
    K2, OC = w_codes.shape
    assert K == K2 and bias.shape == (OC,) and w_delta.shape == (OC,)

    # Lane-dense padding: OC -> multiple of 128 (unmasked stores), K -> multiple of 128
    # (aligned x tiles / MXU contraction).  Zero padding is a fixed point of both
    # quantizers (0 maps to the zero point -> centred code 0), so padded rows/cols
    # contribute nothing to the matmul.
    Kp = _round_up(K, 128)
    OCp = _round_up(OC, 128)

    # Row tiling: one tile when M is small, otherwise row_tile-sized tiles
    # (grid >= 2 also lets the two v7x TensorCores split the work; the extra grid step
    # is negligible on single-TC v5e/v6e).  No silent full-M fallback: pad M instead.
    if M <= row_tile:
        rt, Mp = M, M
    else:
        rt = row_tile
        Mp = _round_up(M, rt)
    grid_m = Mp // rt

    xp = x.astype(jnp.float32)
    if (Mp, Kp) != (M, K):
        xp = jnp.pad(xp, ((0, Mp - M), (0, Kp - K)))
    wcp = w_codes
    if (Kp, OCp) != (K, OC):
        wcp = jnp.pad(w_codes, ((0, Kp - K), (0, OCp - OC)))
    chan = jnp.zeros((2, OCp), jnp.float32)
    chan = chan.at[0, :OC].set(w_delta.astype(jnp.float32))
    chan = chan.at[1, :OC].set(bias.astype(jnp.float32))

    delta, inv_delta, lo, hi = act_scalars
    scalars = jnp.stack([inv_delta, lo, hi, delta]).astype(jnp.float32)

    if emit_stats:
        assert Mp == M, "stats emission requires M to divide evenly into row tiles"
        out_shape = (jax.ShapeDtypeStruct((Mp, OCp), jnp.float32),
                     jax.ShapeDtypeStruct((grid_m * 8, 128), jnp.float32))
        out_specs = (pl.BlockSpec((rt, OCp), lambda i: (i, 0)),
                     pl.BlockSpec((8, 128), lambda i: (i, 0)))
    else:
        out_shape = jax.ShapeDtypeStruct((Mp, OCp), jnp.float32)
        out_specs = pl.BlockSpec((rt, OCp), lambda i: (i, 0))

    # NOTE: the int8 MXU path (v5e/v6e only; v7x has no integer MXU) and
    # pipeline_mode=pl.Buffered(1) on the resident operands are intentionally omitted:
    # the bf16 code path is portable across generations and the resident weight tiles
    # here are far below the VMEM budget, so default double-buffering is harmless.
    kernel = functools.partial(_quant_matmul_kernel, apply_relu=apply_relu,
                               emit_stats=emit_stats, oc_valid=OC)
    res = pl.pallas_call(
        kernel,
        out_shape=out_shape,
        grid=(grid_m,),
        in_specs=[
            pl.BlockSpec(memory_space=pltpu.MemorySpace.SMEM),   # act quant scalars
            pl.BlockSpec((rt, Kp), lambda i: (i, 0)),            # activations (row-tiled)
            pl.BlockSpec((Kp, OCp), lambda i: (0, 0)),           # weight codes (resident)
            pl.BlockSpec((2, OCp), lambda i: (0, 0)),            # per-channel scale / bias
        ],
        out_specs=out_specs,
        compiler_params=pltpu.CompilerParams(dimension_semantics=("parallel",)),
    )(scalars, xp, wcp, chan)

    if emit_stats:
        out_full, stats = res
        st = stats.reshape(grid_m, 8, 128)
        return out_full[:M, :OC], (jnp.min(st[:, 4, 0]), jnp.max(st[:, 0, 0]))
    return res[:M, :OC]


# ---------------------------------------------------------------------------
# UniformAffineQuantizer parameter init (QDrop min/max init) -- plain JAX glue
# ---------------------------------------------------------------------------
def act_quant_scalars(xmin_raw, xmax_raw, n_bits=8):
    """Per-tensor activation quantizer params -> kernel scalars."""
    qmax = 2.0 ** n_bits - 1.0
    xmin = jnp.minimum(xmin_raw, 0.0)
    xmax = jnp.maximum(xmax_raw, 0.0)
    delta = jnp.maximum((xmax - xmin) / qmax, 1e-8)
    zp = jnp.round(-xmin / delta)
    inv_delta = 1.0 / delta          # exact reciprocal; multiplied (not divided) in-kernel
    return delta, inv_delta, -zp, qmax - zp


def weight_quant_codes(w_oc_k, n_bits=8):
    """Per-output-channel weight quantizer: zero-point-centred integer codes (exact in
    bf16) + per-channel step.  Computed once per call (weights are static) instead of
    per row tile inside the kernel."""
    qmax = 2.0 ** n_bits - 1.0
    wmin = jnp.minimum(jnp.min(w_oc_k, axis=1, keepdims=True), 0.0)
    wmax = jnp.maximum(jnp.max(w_oc_k, axis=1, keepdims=True), 0.0)
    delta = jnp.maximum((wmax - wmin) / qmax, 1e-8)
    zp = jnp.round(-wmin / delta)
    codes = jnp.clip(jnp.round(w_oc_k / delta) + zp, 0.0, qmax) - zp   # ints in [-qmax, qmax]
    return codes.astype(jnp.bfloat16), delta[:, 0].astype(jnp.float32)


# ---------------------------------------------------------------------------
# QuantModel.forward for the representative wrapped model
# ---------------------------------------------------------------------------
def quant_model_forward(x, w_conv, b_conv, w_fc, b_fc, n_bits=8):
    # TODO(synk): search_fold_and_remove_bn, the recursive quant_module_refactor and the
    # set_quant_state / bitwidth_refactor bookkeeping are Python graph-surgery with no
    # kernel equivalent; only the resulting numerical forward is implemented here.
    N, C, H, W = x.shape
    OC1, _, KH, KW = w_conv.shape
    OUT = w_fc.shape[0]

    # --- one-time weight preprocessing (input independent) ---
    # conv weight reordered to the NHWC patch feature order (kh, kw, c)
    wk_conv = jnp.transpose(w_conv, (0, 2, 3, 1)).reshape(OC1, KH * KW * C)
    wc_conv, d_conv = weight_quant_codes(wk_conv, n_bits)
    # fc weight columns permuted from NCHW-flatten order to NHWC-flatten order so the
    # conv activation never has to be transposed back to NCHW.
    wk_fc = jnp.transpose(w_fc.reshape(OUT, OC1, H, W), (0, 2, 3, 1)).reshape(OUT, H * W * OC1)
    wc_fc, d_fc = weight_quant_codes(wk_fc, n_bits)

    # ---- QuantModule #1: Conv2d(C, OC1, 3, pad=1) (+folded BN), act=ReLU ----
    a1 = act_quant_scalars(jnp.min(x), jnp.max(x), n_bits)   # min/max are layout independent
    x_nhwc = jnp.transpose(x, (0, 2, 3, 1)).astype(jnp.float32)
    x_padded = jnp.pad(x_nhwc, ((0, 0), (1, 1), (1, 1), (0, 0)))
    # NHWC im2col; padding zeros are a fixed point of the act quantizer.
    patches = jnp.concatenate(
        [x_padded[:, kh:kh + H, kw:kw + W, :] for kh in range(KH) for kw in range(KW)],
        axis=-1).reshape(N * H * W, KH * KW * C)
    conv_out, (mn1, mx1) = quant_matmul(
        patches, jnp.transpose(wc_conv), d_conv, b_conv, a1,
        apply_relu=True, emit_stats=True, row_tile=256)       # [N*H*W, OC1]

    # ---- QuantModule #2: Linear(OC1*H*W, OUT), act=identity ----
    a2 = act_quant_scalars(mn1, mx1, n_bits)   # from in-kernel stats; no extra HBM pass
    flat = conv_out.reshape(N, H * W * OC1)    # NHWC flatten (w_fc columns pre-permuted)
    out = quant_matmul(flat, jnp.transpose(wc_fc), d_fc, b_fc, a2,
                       apply_relu=False, emit_stats=False)
    return out


if __name__ == "__main__":
    key = jax.random.PRNGKey(0)
    k1, k2, k3, k4, k5 = jax.random.split(key, 5)

    N, C, H, W = 2, 4, 16, 16
    OC1, OUT = 8, 10

    x = jax.random.normal(k1, (N, C, H, W), jnp.float32)
    w_conv = jax.random.normal(k2, (OC1, C, 3, 3), jnp.float32) * 0.1
    b_conv = jax.random.normal(k3, (OC1,), jnp.float32) * 0.1
    w_fc = jax.random.normal(k4, (OUT, OC1 * H * W), jnp.float32) * 0.02
    b_fc = jax.random.normal(k5, (OUT,), jnp.float32) * 0.1

    fwd = jax.jit(quant_model_forward)
    y = jax.block_until_ready(fwd(x, w_conv, b_conv, w_fc, b_fc))
    assert y.shape == (N, OUT) and y.dtype == jnp.float32
    print("KERNEL_OK")
</pallas_src>

<mosaic_0001>
module attributes {stable_mosaic.version = 11 : i64} {
  func.func @_quant_matmul_kernel(%arg0: i32, %arg1: memref<4xf32, #tpu.memory_space<smem>>, %arg2: memref<256x128xf32, #tpu.memory_space<vmem>>, %arg3: memref<128x128xbf16, #tpu.memory_space<vmem>>, %arg4: memref<2x128xf32, #tpu.memory_space<vmem>>, %arg5: memref<256x128xf32, #tpu.memory_space<vmem>>, %arg6: memref<8x128xf32, #tpu.memory_space<vmem>>) attributes {dimension_semantics = [#tpu.dimension_semantics<parallel>], iteration_bounds = array<i64: 2>, scalar_prefetch = 0 : i64, scratch_operands = 0 : i64, tpu.core_type = #tpu.core_type<tc>, window_params = [{transform_indices = @transform_0, window_bounds = array<i64: 4>}, {transform_indices = @transform_1, window_bounds = array<i64: 256, 128>}, {pipeline_mode = #tpu.pipeline_mode<synchronous>, transform_indices = @transform_2, window_bounds = array<i64: 128, 128>}, {pipeline_mode = #tpu.pipeline_mode<synchronous>, transform_indices = @transform_3, window_bounds = array<i64: 2, 128>}, {transform_indices = @transform_4, window_bounds = array<i64: 256, 128>}, {transform_indices = @transform_5, window_bounds = array<i64: 8, 128>}]} {
    %c0 = arith.constant 0 : index
    %0 = memref.load %arg1[%c0] : memref<4xf32, #tpu.memory_space<smem>>
    %c1 = arith.constant 1 : index
    %1 = memref.load %arg1[%c1] : memref<4xf32, #tpu.memory_space<smem>>
    %c2 = arith.constant 2 : index
    %2 = memref.load %arg1[%c2] : memref<4xf32, #tpu.memory_space<smem>>
    %c3 = arith.constant 3 : index
    %3 = memref.load %arg1[%c3] : memref<4xf32, #tpu.memory_space<smem>>
    %c0_0 = arith.constant 0 : index
    %c0_1 = arith.constant 0 : index
    %4 = vector.load %arg2[%c0_0, %c0_1] : memref<256x128xf32, #tpu.memory_space<vmem>>, vector<256x128xf32>
    %5 = vector.broadcast %0 : f32 to vector<256x128xf32>
    %6 = arith.mulf %4, %5 : vector<256x128xf32>
    %7 = math.roundeven %6 : vector<256x128xf32>
    %8 = vector.broadcast %1 : f32 to vector<256x128xf32>
    %9 = arith.maximumf %8, %7 : vector<256x128xf32>
    %10 = vector.broadcast %2 : f32 to vector<256x128xf32>
    %11 = arith.minimumf %10, %9 : vector<256x128xf32>
    %12 = arith.truncf %11 : vector<256x128xf32> to vector<256x128xbf16>
    %c0_2 = arith.constant 0 : index
    %c0_3 = arith.constant 0 : index
    %13 = vector.load %arg3[%c0_2, %c0_3] : memref<128x128xbf16, #tpu.memory_space<vmem>>, vector<128x128xbf16>
    %cst = arith.constant dense<0.000000e+00> : vector<256x128xf32>
    %14 = tpu.matmul %12, %13, %cst {dimension_numbers = #tpu.dot_dimension_numbers<[1], [0], [0], [1], [0, 0, 1, 1], [], []>} : vector<256x128xbf16>, vector<128x128xbf16>, vector<256x128xf32> -> vector<256x128xf32>
    %c0_4 = arith.constant 0 : index
    %c0_5 = arith.constant 0 : index
    %15 = vector.load %arg4[%c0_4, %c0_5] : memref<2x128xf32, #tpu.memory_space<vmem>>, vector<1x128xf32>
    %16 = vector.broadcast %3 : f32 to vector<1x128xf32>
    %17 = arith.mulf %16, %15 : vector<1x128xf32>
    %18 = vector.broadcast %17 : vector<1x128xf32> to vector<256x128xf32>
    %19 = arith.mulf %14, %18 : vector<256x128xf32>
    %c1_6 = arith.constant 1 : index
    %c0_7 = arith.constant 0 : index
    %20 = vector.load %arg4[%c1_6, %c0_7] : memref<2x128xf32, #tpu.memory_space<vmem>>, vector<1x128xf32>
    %21 = vector.broadcast %20 : vector<1x128xf32> to vector<256x128xf32>
    %22 = arith.addf %19, %21 : vector<256x128xf32>
    %cst_8 = arith.constant 0.000000e+00 : f32
    %23 = vector.broadcast %cst_8 : f32 to vector<256x128xf32>
    %24 = arith.maximumf %22, %23 : vector<256x128xf32>
    %c0_9 = arith.constant 0 : index
    %c0_10 = arith.constant 0 : index
    %25 = vector.load %arg5[%c0_9, %c0_10] : memref<256x128xf32, #tpu.memory_space<vmem>>, vector<256x128xf32>
    tpu.vector_store %arg5[%c0_9, %c0_10], %24 {strides = array<i32>} : memref<256x128xf32, #tpu.memory_space<vmem>>, vector<256x128xf32>,
    %26 = vector.extract_strided_slice %24 {offsets = [0, 0], sizes = [256, 8], strides = [1, 1]} : vector<256x128xf32> to vector<256x8xf32>
    %cst_11 = arith.constant dense<0xFF800000> : vector<8xf32>
    %27 = vector.multi_reduction <maximumf>, %26, %cst_11 [0] : vector<256x8xf32> to vector<8xf32>
    %28 = vector.shape_cast %27 : vector<8xf32> to vector<1x8xf32>
    %cst_12 = arith.constant dense<0xFF800000> : vector<1xf32>
    %29 = vector.multi_reduction <maximumf>, %28, %cst_12 [1] : vector<1x8xf32> to vector<1xf32>
    %30 = vector.shape_cast %29 : vector<1xf32> to vector<1x1xf32>
    %cst_13 = arith.constant dense<0x7F800000> : vector<8xf32>
    %31 = vector.multi_reduction <minimumf>, %26, %cst_13 [0] : vector<256x8xf32> to vector<8xf32>
    %32 = vector.shape_cast %31 : vector<8xf32> to vector<1x8xf32>
    %cst_14 = arith.constant dense<0x7F800000> : vector<1xf32>
    %33 = vector.multi_reduction <minimumf>, %32, %cst_14 [1] : vector<1x8xf32> to vector<1xf32>
    %34 = vector.shape_cast %33 : vector<1xf32> to vector<1x1xf32>
    %35 = vector.shape_cast %30 : vector<1x1xf32> to vector<1x1xf32>
    %36 = vector.broadcast %35 : vector<1x1xf32> to vector<4x128xf32>
    %c0_15 = arith.constant 0 : index
    %c0_16 = arith.constant 0 : index
    %37 = vector.load %arg6[%c0_15, %c0_16] : memref<8x128xf32, #tpu.memory_space<vmem>>, vector<4x128xf32>
    tpu.vector_store %arg6[%c0_15, %c0_16], %36 {strides = array<i32>} : memref<8x128xf32, #tpu.memory_space<vmem>>, vector<4x128xf32>,
    %38 = vector.shape_cast %34 : vector<1x1xf32> to vector<1x1xf32>
    %39 = vector.broadcast %38 : vector<1x1xf32> to vector<4x128xf32>
    %c4 = arith.constant 4 : index
    %c0_17 = arith.constant 0 : index
    %40 = vector.load %arg6[%c4, %c0_17] : memref<8x128xf32, #tpu.memory_space<vmem>>, vector<4x128xf32>
    tpu.vector_store %arg6[%c4, %c0_17], %39 {strides = array<i32>} : memref<8x128xf32, #tpu.memory_space<vmem>>, vector<4x128xf32>,
    return
  }
  func.func @transform_0(%arg0: i32) -> i32 {
    %c0_i32 = arith.constant 0 : i32
    %c0_i32_0 = arith.constant 0 : i32
    return %c0_i32 : i32
  }
  func.func @transform_1(%arg0: i32) -> (i32, i32) {
    %c0_i32 = arith.constant 0 : i32
    %c0_i32_0 = arith.constant 0 : i32
    return %arg0, %c0_i32 : i32, i32
  }
  func.func @transform_2(%arg0: i32) -> (i32, i32) {
    %c0_i32 = arith.constant 0 : i32
    %c0_i32_0 = arith.constant 0 : i32
    %c0_i32_1 = arith.constant 0 : i32
    return %c0_i32, %c0_i32_0 : i32, i32
  }
  func.func @transform_3(%arg0: i32) -> (i32, i32) {
    %c0_i32 = arith.constant 0 : i32
    %c0_i32_0 = arith.constant 0 : i32
    %c0_i32_1 = arith.constant 0 : i32
    return %c0_i32, %c0_i32_0 : i32, i32
  }
  func.func @transform_4(%arg0: i32) -> (i32, i32) {
    %c0_i32 = arith.constant 0 : i32
    %c0_i32_0 = arith.constant 0 : i32
    return %arg0, %c0_i32 : i32, i32
  }
  func.func @transform_5(%arg0: i32) -> (i32, i32) {
    %c0_i32 = arith.constant 0 : i32
    %c0_i32_0 = arith.constant 0 : i32
    return %arg0, %c0_i32 : i32, i32
  }
}

module attributes {stable_mosaic.version = 11 : i64} {
  func.func @_quant_matmul_kernel(%arg0: i32, %arg1: memref<4xf32, #tpu.memory_space<smem>>, %arg2: memref<2x2048xf32, #tpu.memory_space<vmem>>, %arg3: memref<2048x128xbf16, #tpu.memory_space<vmem>>, %arg4: memref<2x128xf32, #tpu.memory_space<vmem>>, %arg5: memref<2x128xf32, #tpu.memory_space<vmem>>) attributes {dimension_semantics = [#tpu.dimension_semantics<parallel>], iteration_bounds = array<i64: 1>, scalar_prefetch = 0 : i64, scratch_operands = 0 : i64, tpu.core_type = #tpu.core_type<tc>, window_params = [{transform_indices = @transform_0, window_bounds = array<i64: 4>}, {transform_indices = @transform_1, window_bounds = array<i64: 2, 2048>}, {pipeline_mode = #tpu.pipeline_mode<synchronous>, transform_indices = @transform_2, window_bounds = array<i64: 2048, 128>}, {pipeline_mode = #tpu.pipeline_mode<synchronous>, transform_indices = @transform_3, window_bounds = array<i64: 2, 128>}, {transform_indices = @transform_4, window_bounds = array<i64: 2, 128>}]} {
    %c0 = arith.constant 0 : index
    %0 = memref.load %arg1[%c0] : memref<4xf32, #tpu.memory_space<smem>>
    %c1 = arith.constant 1 : index
    %1 = memref.load %arg1[%c1] : memref<4xf32, #tpu.memory_space<smem>>
    %c2 = arith.constant 2 : index
    %2 = memref.load %arg1[%c2] : memref<4xf32, #tpu.memory_space<smem>>
    %c3 = arith.constant 3 : index
    %3 = memref.load %arg1[%c3] : memref<4xf32, #tpu.memory_space<smem>>
    %c0_0 = arith.constant 0 : index
    %c0_1 = arith.constant 0 : index
    %4 = vector.load %arg2[%c0_0, %c0_1] : memref<2x2048xf32, #tpu.memory_space<vmem>>, vector<2x2048xf32>
    %5 = vector.broadcast %0 : f32 to vector<2x2048xf32>
    %6 = arith.mulf %4, %5 : vector<2x2048xf32>
    %7 = math.roundeven %6 : vector<2x2048xf32>
    %8 = vector.broadcast %1 : f32 to vector<2x2048xf32>
    %9 = arith.maximumf %8, %7 : vector<2x2048xf32>
    %10 = vector.broadcast %2 : f32 to vector<2x2048xf32>
    %11 = arith.minimumf %10, %9 : vector<2x2048xf32>
    %12 = arith.truncf %11 : vector<2x2048xf32> to vector<2x2048xbf16>
    %c0_2 = arith.constant 0 : index
    %c0_3 = arith.constant 0 : index
    %13 = vector.load %arg3[%c0_2, %c0_3] : memref<2048x128xbf16, #tpu.memory_space<vmem>>, vector<2048x128xbf16>
    %cst = arith.constant dense<0.000000e+00> : vector<2x128xf32>
    %14 = tpu.matmul %12, %13, %cst {dimension_numbers = #tpu.dot_dimension_numbers<[1], [0], [0], [1], [0, 0, 1, 1], [], []>} : vector<2x2048xbf16>, vector<2048x128xbf16>, vector<2x128xf32> -> vector<2x128xf32>
    %c0_4 = arith.constant 0 : index
    %c0_5 = arith.constant 0 : index
    %15 = vector.load %arg4[%c0_4, %c0_5] : memref<2x128xf32, #tpu.memory_space<vmem>>, vector<1x128xf32>
    %16 = vector.broadcast %3 : f32 to vector<1x128xf32>
    %17 = arith.mulf %16, %15 : vector<1x128xf32>
    %18 = vector.broadcast %17 : vector<1x128xf32> to vector<2x128xf32>
    %19 = arith.mulf %14, %18 : vector<2x128xf32>
    %c1_6 = arith.constant 1 : index
    %c0_7 = arith.constant 0 : index
    %20 = vector.load %arg4[%c1_6, %c0_7] : memref<2x128xf32, #tpu.memory_space<vmem>>, vector<1x128xf32>
    %21 = vector.broadcast %20 : vector<1x128xf32> to vector<2x128xf32>
    %22 = arith.addf %19, %21 : vector<2x128xf32>
    %c0_8 = arith.constant 0 : index
    %c0_9 = arith.constant 0 : index
    %23 = vector.load %arg5[%c0_8, %c0_9] : memref<2x128xf32, #tpu.memory_space<vmem>>, vector<2x128xf32>
    tpu.vector_store %arg5[%c0_8, %c0_9], %22 {strides = array<i32>} : memref<2x128xf32, #tpu.memory_space<vmem>>, vector<2x128xf32>,
    return
  }
  func.func @transform_0(%arg0: i32) -> i32 {
    %c0_i32 = arith.constant 0 : i32
    %c0_i32_0 = arith.constant 0 : i32
    return %c0_i32 : i32
  }
  func.func @transform_1(%arg0: i32) -> (i32, i32) {
    %c0_i32 = arith.constant 0 : i32
    %c0_i32_0 = arith.constant 0 : i32
    return %arg0, %c0_i32 : i32, i32
  }
  func.func @transform_2(%arg0: i32) -> (i32, i32) {
    %c0_i32 = arith.constant 0 : i32
    %c0_i32_0 = arith.constant 0 : i32
    %c0_i32_1 = arith.constant 0 : i32
    return %c0_i32, %c0_i32_0 : i32, i32
  }
  func.func @transform_3(%arg0: i32) -> (i32, i32) {
    %c0_i32 = arith.constant 0 : i32
    %c0_i32_0 = arith.constant 0 : i32
    %c0_i32_1 = arith.constant 0 : i32
    return %c0_i32, %c0_i32_0 : i32, i32
  }
  func.func @transform_4(%arg0: i32) -> (i32, i32) {
    %c0_i32 = arith.constant 0 : i32
    %c0_i32_0 = arith.constant 0 : i32
    return %arg0, %c0_i32 : i32, i32
  }
}

</mosaic_0001>

<llo_original>
// kernel: quant_model_forward.2
$region0: #{quant_model_forward.2}
  #allocation0 [shape = 'u32[]', space=smem, size = 0x4, offset = 0x4, fixed_abs, tag = 'smem constant byte address 0x4 - core index']
  #allocation1 [shape = 'u32[144,128]{1,0:T(1,128)}', space=vmem, size = 0x12000, scoped, tag = 'internal scratch']
  %s0 = inlined_call_operand.vmem [shape: f32[4], index: 0, kind: input, shape index: {}]
  %s1 = inlined_call_operand.vmem [shape: f32[512,128], index: 1, kind: input, shape index: {}]
  %s2 = inlined_call_operand.vmem [shape: bf16[128,128], index: 2, kind: input, shape index: {}]
  %s3 = inlined_call_operand.vmem [shape: f32[2,128], index: 3, kind: input, shape index: {}]
  %s4 = inlined_call_operand.vmem [shape: f32[512,128], index: 4, kind: output, shape index: {0}]
  %s5 = inlined_call_operand.vmem [shape: f32[16,128], index: 5, kind: output, shape index: {1}]
  %6 = xla_tuple %s4, %s5
  %s7 = sld [smem:[#allocation0]]
  $region61: #{quant_model_forward.2} parent=0
    _
  %s9 = ssub.s32 1, %s7
  %s10 = scalar_select 0, %s9, %s7
  $region1: #{quant_model_forward.2} parent=0
    #allocation2 [shape = 'u8[512]{0}', space=smem, size = 0x200, scoped, tag = 'input window, operand 0, single buffered']
    #allocation3 [shape = 's32[2]{0}', space=sflag, size = 0x8, scoped, tag = 'scoped memory for quant_model_forward.2']
    %11 = vsyncpa [#allocation3], 0
    loop: start=0, step=1, limit=4
    $region2: #{quant_model_forward.2} parent=1 // loop_pre_header
      _
    $region3: #{quant_model_forward.2} parent=1 // loop_header
      %s13 = sphi 0, %s17
      %p14 = scmp.ge.s32.totalorder %s13, 4
      %s21 = sphi 0, %s21
      %s23 = sphi 0, %s21
      %s24 = sphi 0, %s23
      %s38 = sphi 0, %s24
      %s44 = sphi 0, %s46
      %s47 = sphi 0, %s44
      %s48 = sphi 0, %s47
      %s64 = sphi 0, %s48
      %s68 = sphi 0, %s68
      %s70 = sphi 0, %s68
      %s71 = sphi 0, %s70
      %s85 = sphi 0, %s71
      %s89 = sphi 0, %s89
      %s91 = sphi 0, %s89
      %s92 = sphi 0, %s91
      %s106 = sphi 0, %s92
      %s112 = sphi 0, %s114
      %s115 = sphi 0, %s112
      %s116 = sphi 0, %s115
      %s132 = sphi 0, %s116
      %s138 = sphi 0, %s140
      %s141 = sphi 0, %s138
      %s142 = sphi 0, %s141
      %s158 = sphi 0, %s142
    $region4: #{quant_model_forward.2} parent=1 // loop_header_branch
      %16 = sbr.rel (%p14) target = $region8
    $region5: #{quant_model_forward.2} parent=1 // loop_body
      %s18 = ssub.s32 %s13, 1
      %s19 = ssub.s32 %s13, 2
      %s20 = sadd.s32 %s13, 1
      %s22 = sadd.s32 %s21, 1
      %p25 = scmp.eq.s32.totalorder %s13, 1
      %p26 = scmp.ne.s32.totalorder %s21, %s23
      %p27 = scmp.eq.s32.totalorder %s13, 0
      %p28 = por %p26, %p27
      %p29 = scmp.ne.s32.totalorder %s21, %s23
      %p30 = scmp.eq.s32.totalorder %s18, 1
      %p31 = por %p29, %p30
      %p32 = scmp.ne.s32.totalorder %s23, %s24
      %p33 = scmp.eq.s32.totalorder %s18, 0
      %p34 = por %p32, %p33
      %p35 = scmp.ne.s32.totalorder %s23, %s24
      %p36 = scmp.eq.s32.totalorder %s19, 1
      %p37 = por %p35, %p36
      %p39 = scmp.ne.s32.totalorder %s24, %s38
      %p40 = scmp.eq.s32.totalorder %s19, 0
      %p41 = por %p39, %p40
      %s42 = ssub.s32 %s13, %s20
      %p43 = scmp.eq.s32.totalorder %s42, 0
      %s45 = sadd.s32 %s44, 1
      %s46 = scalar_select %p43, %s44, %s45
      %p49 = pneg %p43
      %p50 = scmp.eq.s32.totalorder %s13, 1
      %p51 = por %p49, %p50
      %p52 = scmp.ne.s32.totalorder %s44, %s47
      %p53 = scmp.eq.s32.totalorder %s13, 0
      %p54 = por %p52, %p53
      %p55 = scmp.ne.s32.totalorder %s44, %s47
      %p56 = scmp.eq.s32.totalorder %s18, 1
      %p57 = por %p55, %p56
      %p58 = scmp.ne.s32.totalorder %s47, %s48
      %p59 = scmp.eq.s32.totalorder %s18, 0
      %p60 = por %p58, %p59
      %p61 = scmp.ne.s32.totalorder %s47, %s48
      %p62 = scmp.eq.s32.totalorder %s19, 1
      %p63 = por %p61, %p62
      %p65 = scmp.ne.s32.totalorder %s48, %s64
      %p66 = scmp.eq.s32.totalorder %s19, 0
      %p67 = por %p65, %p66
      %s69 = sadd.s32 %s68, 1
      %p72 = scmp.eq.s32.totalorder %s13, 1
      %p73 = scmp.ne.s32.totalorder %s68, %s70
      %p74 = scmp.eq.s32.totalorder %s13, 0
      %p75 = por %p73, %p74
      %p76 = scmp.ne.s32.totalorder %s68, %s70
      %p77 = scmp.eq.s32.totalorder %s18, 1
      %p78 = por %p76, %p77
      %p79 = scmp.ne.s32.totalorder %s70, %s71
      %p80 = scmp.eq.s32.totalorder %s18, 0
      %p81 = por %p79, %p80
      %p82 = scmp.ne.s32.totalorder %s70, %s71
      %p83 = scmp.eq.s32.totalorder %s19, 1
      %p84 = por %p82, %p83
      %p86 = scmp.ne.s32.totalorder %s71, %s85
      %p87 = scmp.eq.s32.totalorder %s19, 0
      %p88 = por %p86, %p87
      %s90 = sadd.s32 %s89, 1
      %p93 = scmp.eq.s32.totalorder %s13, 1
      %p94 = scmp.ne.s32.totalorder %s89, %s91
      %p95 = scmp.eq.s32.totalorder %s13, 0
      %p96 = por %p94, %p95
      %p97 = scmp.ne.s32.totalorder %s89, %s91
      %p98 = scmp.eq.s32.totalorder %s18, 1
      %p99 = por %p97, %p98
      %p100 = scmp.ne.s32.totalorder %s91, %s92
      %p101 = scmp.eq.s32.totalorder %s18, 0
      %p102 = por %p100, %p101
      %p103 = scmp.ne.s32.totalorder %s91, %s92
      %p104 = scmp.eq.s32.totalorder %s19, 1
      %p105 = por %p103, %p104
      %p107 = scmp.ne.s32.totalorder %s92, %s106
      %p108 = scmp.eq.s32.totalorder %s19, 0
      %p109 = por %p107, %p108
      %s110 = ssub.s32 %s13, %s20
      %p111 = scmp.eq.s32.totalorder %s110, 0
      %s113 = sadd.s32 %s112, 1
      %s114 = scalar_select %p111, %s112, %s113
      %p117 = pneg %p111
      %p118 = scmp.eq.s32.totalorder %s13, 1
      %p119 = por %p117, %p118
      %p120 = scmp.ne.s32.totalorder %s112, %s115
      %p121 = scmp.eq.s32.totalorder %s13, 0
      %p122 = por %p120, %p121
      %p123 = scmp.ne.s32.totalorder %s112, %s115
      %p124 = scmp.eq.s32.totalorder %s18, 1
      %p125 = por %p123, %p124
      %p126 = scmp.ne.s32.totalorder %s115, %s116
      %p127 = scmp.eq.s32.totalorder %s18, 0
      %p128 = por %p126, %p127
      %p129 = scmp.ne.s32.totalorder %s115, %s116
      %p130 = scmp.eq.s32.totalorder %s19, 1
      %p131 = por %p129, %p130
      %p133 = scmp.ne.s32.totalorder %s116, %s132
      %p134 = scmp.eq.s32.totalorder %s19, 0
      %p135 = por %p133, %p134
      %s136 = ssub.s32 %s13, %s20
      %p137 = scmp.eq.s32.totalorder %s136, 0
      %s139 = sadd.s32 %s138, 1
      %s140 = scalar_select %p137, %s138, %s139
      %p143 = pneg %p137
      %p144 = scmp.eq.s32.totalorder %s13, 1
      %p145 = por %p143, %p144
      %p146 = scmp.ne.s32.totalorder %s138, %s141
      %p147 = scmp.eq.s32.totalorder %s13, 0
      %p148 = por %p146, %p147
      %p149 = scmp.ne.s32.totalorder %s138, %s141
      %p150 = scmp.eq.s32.totalorder %s18, 1
      %p151 = por %p149, %p150
      %p152 = scmp.ne.s32.totalorder %s141, %s142
      %p153 = scmp.eq.s32.totalorder %s18, 0
      %p154 = por %p152, %p153
      %p155 = scmp.ne.s32.totalorder %s141, %s142
      %p156 = scmp.eq.s32.totalorder %s19, 1
      %p157 = por %p155, %p156
      %p159 = scmp.ne.s32.totalorder %s142, %s158
      %p160 = scmp.eq.s32.totalorder %s19, 0
      %p161 = por %p159, %p160
      %p162 = scmp.le.s32.totalorder 1, %s13
      %p163 = scmp.lt.s32.totalorder %s13, 3
      %p164 = pnand %p162, %p163
      %p165 = pneg %p164
      // Predicated region
      $region9: #{quant_model_forward.2} parent=5 // pred_check
        _
      $region10: #{quant_model_forward.2} parent=5 // pred_check_branch
        %167 = sbr.rel (%p164) target = $region12
      $region11: #{quant_model_forward.2} parent=5 // pred_region
        %s168 = ssub.s32 %s13, 1
        // Predicated region
        $region13: #{quant_model_forward.2} parent=11 // pred_check
          %p169 = pneg %p34
        $region14: #{quant_model_forward.2} parent=11 // pred_check_branch
          %171 = sbr.rel (%p169) target = $region16
        $region15: #{quant_model_forward.2} parent=11 // pred_region
          %s173 = ssub.s32 16, 16
          %174 = vsyncadd [#allocation3], %s173
          %s176 = sshll.u32 %s0, 4
          %s177 = int_to_ptr.vmem [resolvable:$true] %s176
          %179 = dma.vmem_to_smem %s177, 16, [#allocation2], [#allocation3]
        $region16: #{quant_model_forward.2} parent=11 // pred_fallthru
          _
        // Predicated region
        $region17: #{quant_model_forward.2} parent=11 // pred_check
          %p180 = pneg %p81
        $region18: #{quant_model_forward.2} parent=11 // pred_check_branch
          %182 = sbr.rel (%p180) target = $region20
        $region19: #{quant_model_forward.2} parent=11 // pred_region
          _
        $region20: #{quant_model_forward.2} parent=11 // pred_fallthru
          _
        // Predicated region
        $region21: #{quant_model_forward.2} parent=11 // pred_check
          %p183 = pneg %p102
        $region22: #{quant_model_forward.2} parent=11 // pred_check_branch
          %185 = sbr.rel (%p183) target = $region24
        $region23: #{quant_model_forward.2} parent=11 // pred_region
          _
        $region24: #{quant_model_forward.2} parent=11 // pred_fallthru
          _
      $region12: #{quant_model_forward.2} parent=5 // pred_fallthru
        _
      %p186 = scmp.lt.s32.totalorder %s13, 2
      // Predicated region
      $region25: #{quant_model_forward.2} parent=5 // pred_check
        %p187 = pneg %p186
      $region26: #{quant_model_forward.2} parent=5 // pred_check_branch
        %189 = sbr.rel (%p187) target = $region28
      $region27: #{quant_model_forward.2} parent=5 // pred_region
        // Predicated region
        $region29: #{quant_model_forward.2} parent=27 // pred_check
          %p190 = pneg %p54
        $region30: #{quant_model_forward.2} parent=27 // pred_check_branch
          %192 = sbr.rel (%p190) target = $region32
        $region31: #{quant_model_forward.2} parent=27 // pred_region
          %s193 = smul.u32 32, %s13
          %p194 = scmp.lt.s32.totalorder %s193, 63
          %s195 = scalar_select %p194, %s193, 63
          %s196 = smul.addr %s195, 8
          %s197 = scalar_lea.vmem %s1, %s196
          %s198 = smul.u32 32, %s13
        $region32: #{quant_model_forward.2} parent=27 // pred_fallthru
          _
      $region28: #{quant_model_forward.2} parent=5 // pred_fallthru
        _
      %p199 = scmp.le.s32.totalorder 1, %s13
      %p200 = scmp.lt.s32.totalorder %s13, 3
      %p201 = pnand %p199, %p200
      %p202 = pneg %p201
      // Predicated region
      $region33: #{quant_model_forward.2} parent=5 // pred_check
        _
      $region34: #{quant_model_forward.2} parent=5 // pred_check_branch
        %204 = sbr.rel (%p201) target = $region36
      $region35: #{quant_model_forward.2} parent=5 // pred_region
        %s205 = ssub.s32 %s13, 1
        // Predicated region
        $region37: #{quant_model_forward.2} parent=35 // pred_check
          %p206 = pneg %p34
        $region38: #{quant_model_forward.2} parent=35 // pred_check_branch
          %208 = sbr.rel (%p206) target = $region40
        $region39: #{quant_model_forward.2} parent=35 // pred_region
          %209 = dma.done [#allocation3], 16
        $region40: #{quant_model_forward.2} parent=35 // pred_fallthru
          _
        %210 = sfence
        %p211 = pneg %p34
        %p212 = pneg %p31
        %s213 = smul.u32 32, %s18
        %p214 = scmp.lt.s32.totalorder %s213, 63
        %s215 = scalar_select %p214, %s213, 63
        %s216 = smul.addr %s215, 8
        %s217 = scalar_lea.vmem %s1, %s216
        %p218 = pneg %p60
        %p219 = pneg %p57
        %p220 = pneg %p81
        %p221 = pneg %p78
        %p222 = pneg %p102
        %p223 = pneg %p99
        %p224 = pneg %p128
        %p225 = pneg %p125
        %s226 = smul.u32 32, %s18
        %p227 = scmp.lt.s32.totalorder %s226, 63
        %s228 = scalar_select %p227, %s226, 63
        %s229 = smul.addr %s228, 8
        %s230 = scalar_lea.vmem %s4, %s229
        %p231 = pneg %p154
        %p232 = pneg %p151
        %p233 = scmp.lt.s32.totalorder %s18, 1
        %s234 = scalar_select %p233, %s18, 1
        %s235 = smul.addr %s234, 8
        %s236 = scalar_lea.vmem %s5, %s235
        %s237 = smul.u32 32, %s18
        %p238 = scmp.lt.s32.totalorder %s237, 63
        %s239 = scalar_select %p238, %s237, 63
        %s240 = smul.addr %s239, 8
        %s241 = scalar_lea.vmem %s1, %s240
        %s242 = smul.u32 32, %s18
        %s243 = smul.u32 32, %s18
        %p244 = scmp.lt.s32.totalorder %s243, 63
        %s245 = scalar_select %p244, %s243, 63
        %s246 = smul.addr %s245, 8
        %s247 = scalar_lea.vmem %s4, %s246
        %s248 = smul.u32 32, %s18
        %p249 = scmp.lt.s32.totalorder %s18, 1
        %s250 = scalar_select %p249, %s18, 1
        %s251 = smul.addr %s250, 8
        %s252 = scalar_lea.vmem %s5, %s251
        %s254 = sld [smem:[#allocation2]]
        %s255 = sld [smem:[#allocation2 + $0x1]]
        %s256 = sld [smem:[#allocation2 + $0x2]]
        %s257 = sld [smem:[#allocation2 + $0x3]]
        %v258 = vld [vmem:[%s241] sm:$0xff]
        %v259 = vld [vmem:[%s241 + $0x8] sm:$0xff]
        %v260 = vld [vmem:[%s241 + $0x10] sm:$0xff]
        %v261 = vld [vmem:[%s241 + $0x18] sm:$0xff]
        %v262 = vld [vmem:[%s241 + $0x20] sm:$0xff]
        %v263 = vld [vmem:[%s241 + $0x28] sm:$0xff]
        %v264 = vld [vmem:[%s241 + $0x30] sm:$0xff]
        %v265 = vld [vmem:[%s241 + $0x38] sm:$0xff]
        %v266 = vld [vmem:[%s241 + $0x40] sm:$0xff]
        %v267 = vld [vmem:[%s241 + $0x48] sm:$0xff]
        %v268 = vld [vmem:[%s241 + $0x50] sm:$0xff]
        %v269 = vld [vmem:[%s241 + $0x58] sm:$0xff]
        %v270 = vld [vmem:[%s241 + $0x60] sm:$0xff]
        %v271 = vld [vmem:[%s241 + $0x68] sm:$0xff]
        %v272 = vld [vmem:[%s241 + $0x70] sm:$0xff]
        %v273 = vld [vmem:[%s241 + $0x78] sm:$0xff]
        %v274 = vld [vmem:[%s241 + $0x80] sm:$0xff]
        %v275 = vld [vmem:[%s241 + $0x88] sm:$0xff]
        %v276 = vld [vmem:[%s241 + $0x90] sm:$0xff]
        %v277 = vld [vmem:[%s241 + $0x98] sm:$0xff]
        %v278 = vld [vmem:[%s241 + $0xa0] sm:$0xff]
        %v279 = vld [vmem:[%s241 + $0xa8] sm:$0xff]
        %v280 = vld [vmem:[%s241 + $0xb0] sm:$0xff]
        %v281 = vld [vmem:[%s241 + $0xb8] sm:$0xff]
        %v282 = vld [vmem:[%s241 + $0xc0] sm:$0xff]
        %v283 = vld [vmem:[%s241 + $0xc8] sm:$0xff]
        %v284 = vld [vmem:[%s241 + $0xd0] sm:$0xff]
        %v285 = vld [vmem:[%s241 + $0xd8] sm:$0xff]
        %v286 = vld [vmem:[%s241 + $0xe0] sm:$0xff]
        %v287 = vld [vmem:[%s241 + $0xe8] sm:$0xff]
        %v288 = vld [vmem:[%s241 + $0xf0] sm:$0xff]
        %v289 = vld [vmem:[%s241 + $0xf8] sm:$0xff]
        %v290 = vstv %s254
        %v291 = vmul.f32 %v258, %v290
        %v292 = vmul.f32 %v259, %v290
        %v293 = vmul.f32 %v260, %v290
        %v294 = vmul.f32 %v261, %v290
        %v295 = vmul.f32 %v262, %v290
        %v296 = vmul.f32 %v263, %v290
        %v297 = vmul.f32 %v264, %v290
        %v298 = vmul.f32 %v265, %v290
        %v299 = vmul.f32 %v266, %v290
        %v300 = vmul.f32 %v267, %v290
        %v301 = vmul.f32 %v268, %v290
        %v302 = vmul.f32 %v269, %v290
        %v303 = vmul.f32 %v270, %v290
        %v304 = vmul.f32 %v271, %v290
        %v305 = vmul.f32 %v272, %v290
        %v306 = vmul.f32 %v273, %v290
        %v307 = vmul.f32 %v274, %v290
        %v308 = vmul.f32 %v275, %v290
        %v309 = vmul.f32 %v276, %v290
        %v310 = vmul.f32 %v277, %v290
        %v311 = vmul.f32 %v278, %v290
        %v312 = vmul.f32 %v279, %v290
        %v313 = vmul.f32 %v280, %v290
        %v314 = vmul.f32 %v281, %v290
        %v315 = vmul.f32 %v282, %v290
        %v316 = vmul.f32 %v283, %v290
        %v317 = vmul.f32 %v284, %v290
        %v318 = vmul.f32 %v285, %v290
        %v319 = vmul.f32 %v286, %v290
        %v320 = vmul.f32 %v287, %v290
        %v321 = vmul.f32 %v288, %v290
        %v322 = vmul.f32 %v289, %v290
        %v323 = vround.ne.pseudo %v291
        %v324 = vround.ne.pseudo %v292
        %v325 = vround.ne.pseudo %v293
        %v326 = vround.ne.pseudo %v294
        %v327 = vround.ne.pseudo %v295
        %v328 = vround.ne.pseudo %v296
        %v329 = vround.ne.pseudo %v297
        %v330 = vround.ne.pseudo %v298
        %v331 = vround.ne.pseudo %v299
        %v332 = vround.ne.pseudo %v300
        %v333 = vround.ne.pseudo %v301
        %v334 = vround.ne.pseudo %v302
        %v335 = vround.ne.pseudo %v303
        %v336 = vround.ne.pseudo %v304
        %v337 = vround.ne.pseudo %v305
        %v338 = vround.ne.pseudo %v306
        %v339 = vround.ne.pseudo %v307
        %v340 = vround.ne.pseudo %v308
        %v341 = vround.ne.pseudo %v309
        %v342 = vround.ne.pseudo %v310
        %v343 = vround.ne.pseudo %v311
        %v344 = vround.ne.pseudo %v312
        %v345 = vround.ne.pseudo %v313
        %v346 = vround.ne.pseudo %v314
        %v347 = vround.ne.pseudo %v315
        %v348 = vround.ne.pseudo %v316
        %v349 = vround.ne.pseudo %v317
        %v350 = vround.ne.pseudo %v318
        %v351 = vround.ne.pseudo %v319
        %v352 = vround.ne.pseudo %v320
        %v353 = vround.ne.pseudo %v321
        %v354 = vround.ne.pseudo %v322
        %v355 = vstv %s255
        %v356 = vmax.f32 %v355, %v323
        %v357 = vmax.f32 %v355, %v324
        %v358 = vmax.f32 %v355, %v325
        %v359 = vmax.f32 %v355, %v326
        %v360 = vmax.f32 %v355, %v327
        %v361 = vmax.f32 %v355, %v328
        %v362 = vmax.f32 %v355, %v329
        %v363 = vmax.f32 %v355, %v330
        %v364 = vmax.f32 %v355, %v331
        %v365 = vmax.f32 %v355, %v332
        %v366 = vmax.f32 %v355, %v333
        %v367 = vmax.f32 %v355, %v334
        %v368 = vmax.f32 %v355, %v335
        %v369 = vmax.f32 %v355, %v336
        %v370 = vmax.f32 %v355, %v337
        %v371 = vmax.f32 %v355, %v338
        %v372 = vmax.f32 %v355, %v339
        %v373 = vmax.f32 %v355, %v340
        %v374 = vmax.f32 %v355, %v341
        %v375 = vmax.f32 %v355, %v342
        %v376 = vmax.f32 %v355, %v343
        %v377 = vmax.f32 %v355, %v344
        %v378 = vmax.f32 %v355, %v345
        %v379 = vmax.f32 %v355, %v346
        %v380 = vmax.f32 %v355, %v347
        %v381 = vmax.f32 %v355, %v348
        %v382 = vmax.f32 %v355, %v349
        %v383 = vmax.f32 %v355, %v350
        %v384 = vmax.f32 %v355, %v351
        %v385 = vmax.f32 %v355, %v352
        %v386 = vmax.f32 %v355, %v353
        %v387 = vmax.f32 %v355, %v354
        %v388 = vstv %s256
        %v389 = vmin.f32 %v388, %v356
        %v390 = vmin.f32 %v388, %v357
        %v391 = vmin.f32 %v388, %v358
        %v392 = vmin.f32 %v388, %v359
        %v393 = vmin.f32 %v388, %v360
        %v394 = vmin.f32 %v388, %v361
        %v395 = vmin.f32 %v388, %v362
        %v396 = vmin.f32 %v388, %v363
        %v397 = vmin.f32 %v388, %v364
        %v398 = vmin.f32 %v388, %v365
        %v399 = vmin.f32 %v388, %v366
        %v400 = vmin.f32 %v388, %v367
        %v401 = vmin.f32 %v388, %v368
        %v402 = vmin.f32 %v388, %v369
        %v403 = vmin.f32 %v388, %v370
        %v404 = vmin.f32 %v388, %v371
        %v405 = vmin.f32 %v388, %v372
        %v406 = vmin.f32 %v388, %v373
        %v407 = vmin.f32 %v388, %v374
        %v408 = vmin.f32 %v388, %v375
        %v409 = vmin.f32 %v388, %v376
        %v410 = vmin.f32 %v388, %v377
        %v411 = vmin.f32 %v388, %v378
        %v412 = vmin.f32 %v388, %v379
        %v413 = vmin.f32 %v388, %v380
        %v414 = vmin.f32 %v388, %v381
        %v415 = vmin.f32 %v388, %v382
        %v416 = vmin.f32 %v388, %v383
        %v417 = vmin.f32 %v388, %v384
        %v418 = vmin.f32 %v388, %v385
        %v419 = vmin.f32 %v388, %v386
        %v420 = vmin.f32 %v388, %v387
        %v421 = vpack.c.bf16 %v390, %v389
        %v422 = vpack.c.bf16 %v392, %v391
        %v423 = vpack.c.bf16 %v394, %v393
        %v424 = vpack.c.bf16 %v396, %v395
        %v425 = vpack.c.bf16 %v398, %v397
        %v426 = vpack.c.bf16 %v400, %v399
        %v427 = vpack.c.bf16 %v402, %v401
        %v428 = vpack.c.bf16 %v404, %v403
        %v429 = vpack.c.bf16 %v406, %v405
        %v430 = vpack.c.bf16 %v408, %v407
        %v431 = vpack.c.bf16 %v410, %v409
        %v432 = vpack.c.bf16 %v412, %v411
        %v433 = vpack.c.bf16 %v414, %v413
        %v434 = vpack.c.bf16 %v416, %v415
        %v435 = vpack.c.bf16 %v418, %v417
        %v436 = vpack.c.bf16 %v420, %v419
        %v437 = vld [vmem:[%s2] sm:$0xf]
        %v438 = vld [vmem:[%s2 + $0x4] sm:$0xf]
        %v439 = vld [vmem:[%s2 + $0x8] sm:$0xf]
        %v440 = vld [vmem:[%s2 + $0xc] sm:$0xf]
        %v441 = vld [vmem:[%s2 + $0x10] sm:$0xf]
        %v442 = vld [vmem:[%s2 + $0x14] sm:$0xf]
        %v443 = vld [vmem:[%s2 + $0x18] sm:$0xf]
        %v444 = vld [vmem:[%s2 + $0x1c] sm:$0xf]
        %v445 = vld [vmem:[%s2 + $0x20] sm:$0xf]
        %v446 = vld [vmem:[%s2 + $0x24] sm:$0xf]
        %v447 = vld [vmem:[%s2 + $0x28] sm:$0xf]
        %v448 = vld [vmem:[%s2 + $0x2c] sm:$0xf]
        %v449 = vld [vmem:[%s2 + $0x30] sm:$0xf]
        %v450 = vld [vmem:[%s2 + $0x34] sm:$0xf]
        %v451 = vld [vmem:[%s2 + $0x38] sm:$0xf]
        %v452 = vld [vmem:[%s2 + $0x3c] sm:$0xf]
        %v469 = vunpack.c.l.b16 %v437
        %v470 = vunpack.c.l.b16 %v438
        %v471 = vunpack.c.l.b16 %v439
        %v472 = vunpack.c.l.b16 %v440
        %v473 = vunpack.c.l.b16 %v441
        %v474 = vunpack.c.l.b16 %v442
        %v475 = vunpack.c.l.b16 %v443
        %v476 = vunpack.c.l.b16 %v444
        %v477 = vunpack.c.l.b16 %v445
        %v478 = vunpack.c.l.b16 %v446
        %v479 = vunpack.c.l.b16 %v447
        %v480 = vunpack.c.l.b16 %v448
        %v481 = vunpack.c.l.b16 %v449
        %v482 = vunpack.c.l.b16 %v450
        %v483 = vunpack.c.l.b16 %v451
        %v484 = vunpack.c.l.b16 %v452
        %v485 = vpack.c.b16 %v470, %v469
        %v486 = vpack.c.b16 %v472, %v471
        %v487 = vpack.c.b16 %v474, %v473
        %v488 = vpack.c.b16 %v476, %v475
        %v489 = vpack.c.b16 %v478, %v477
        %v490 = vpack.c.b16 %v480, %v479
        %v491 = vpack.c.b16 %v482, %v481
        %v492 = vpack.c.b16 %v484, %v483
        %501 = vmatprep.subr.bf16.mxu0 0
        %502 = vmatpush1.bf16.msra.mxu0 %v485
        %503 = vmatprep.subr.bf16.mxu0 0
        %504 = vmatpush1.bf16.msra.mxu0 %v486
        %505 = vmatprep.subr.bf16.mxu0 0
        %506 = vmatpush1.bf16.msra.mxu0 %v487
        %507 = vmatprep.subr.bf16.mxu0 0
        %508 = vmatpush1.bf16.msra.mxu0 %v488
        %509 = vmatprep.subr.bf16.mxu0 0
        %510 = vmatpush1.bf16.msra.mxu0 %v489
        %511 = vmatprep.subr.bf16.mxu0 0
        %512 = vmatpush1.bf16.msra.mxu0 %v490
        %513 = vmatprep.subr.bf16.mxu0 0
        %514 = vmatpush1.bf16.msra.mxu0 %v491
        %515 = vmatprep.subr.bf16.mxu0 0
        %516 = vmatpush1.bf16.msra.mxu0 %v492
        %517 = vmatprep.subr.bf16.mxu0 0
        %518 = vmatpush1.bf16.msra.mxu0 0
        %519 = vmatprep.subr.bf16.mxu0 0
        %520 = vmatpush1.bf16.msra.mxu0 0
        %521 = vmatprep.subr.bf16.mxu0 0
        %522 = vmatpush1.bf16.msra.mxu0 0
        %523 = vmatprep.subr.bf16.mxu0 0
        %524 = vmatpush1.bf16.msra.mxu0 0
        %525 = vmatprep.subr.bf16.mxu0 0
        %526 = vmatpush1.bf16.msra.mxu0 0
        %527 = vmatprep.subr.bf16.mxu0 0
        %528 = vmatpush1.bf16.msra.mxu0 0
        %529 = vmatprep.subr.bf16.mxu0 0
        %530 = vmatpush1.bf16.msra.mxu0 0
        %531 = vmatprep.subr.bf16.mxu0 0
        %532 = vmatpush1.bf16.msra.mxu0 0
        %533 = vmatprep.mubr.bf16.mxu0 0
        %534 = vmatmul.mubr.bf16.gmra.mrb[0].mxu0 %v421
        %v535 = vpop.f32.mrb[0].mxu0
        %v536 = vadd.f32 0.0, %v535
        %v537 = vpop.f32.mrb[0].mxu0
        %v538 = vpop.f32.mrb[0].mxu0
        %v539 = vadd.f32 0.0, %v538
        %v540 = vpop.f32.mrb[0].mxu0
        %541 = vmatprep.mubr.bf16.mxu0 0
        %542 = vmatmul.mubr.bf16.gmra.mrb[0].mxu0 %v422
        %v543 = vpop.f32.mrb[0].mxu0
        %v544 = vadd.f32 0.0, %v543
        %v545 = vpop.f32.mrb[0].mxu0
        %v546 = vpop.f32.mrb[0].mxu0
        %v547 = vadd.f32 0.0, %v546
        %v548 = vpop.f32.mrb[0].mxu0
        %549 = vmatprep.mubr.bf16.mxu0 0
        %550 = vmatmul.mubr.bf16.gmra.mrb[0].mxu0 %v423
        %v551 = vpop.f32.mrb[0].mxu0
        %v552 = vadd.f32 0.0, %v551
        %v553 = vpop.f32.mrb[0].mxu0
        %v554 = vpop.f32.mrb[0].mxu0
        %v555 = vadd.f32 0.0, %v554
        %v556 = vpop.f32.mrb[0].mxu0
        %557 = vmatprep.mubr.bf16.mxu0 0
        %558 = vmatmul.mubr.bf16.gmra.mrb[0].mxu0 %v424
        %v559 = vpop.f32.mrb[0].mxu0
        %v560 = vadd.f32 0.0, %v559
        %v561 = vpop.f32.mrb[0].mxu0
        %v562 = vpop.f32.mrb[0].mxu0
        %v563 = vadd.f32 0.0, %v562
        %v564 = vpop.f32.mrb[0].mxu0
        %565 = vmatprep.mubr.bf16.mxu0 0
        %566 = vmatmul.mubr.bf16.gmra.mrb[0].mxu0 %v425
        %v567 = vpop.f32.mrb[0].mxu0
        %v568 = vadd.f32 0.0, %v567
        %v569 = vpop.f32.mrb[0].mxu0
        %v570 = vpop.f32.mrb[0].mxu0
        %v571 = vadd.f32 0.0, %v570
        %v572 = vpop.f32.mrb[0].mxu0
        %573 = vmatprep.mubr.bf16.mxu0 0
        %574 = vmatmul.mubr.bf16.gmra.mrb[0].mxu0 %v426
        %v575 = vpop.f32.mrb[0].mxu0
        %v576 = vadd.f32 0.0, %v575
        %v577 = vpop.f32.mrb[0].mxu0
        %v578 = vpop.f32.mrb[0].mxu0
        %v579 = vadd.f32 0.0, %v578
        %v580 = vpop.f32.mrb[0].mxu0
        %581 = vmatprep.mubr.bf16.mxu0 0
        %582 = vmatmul.mubr.bf16.gmra.mrb[0].mxu0 %v427
        %v583 = vpop.f32.mrb[0].mxu0
        %v584 = vadd.f32 0.0, %v583
        %v585 = vpop.f32.mrb[0].mxu0
        %v586 = vpop.f32.mrb[0].mxu0
        %v587 = vadd.f32 0.0, %v586
        %v588 = vpop.f32.mrb[0].mxu0
        %589 = vmatprep.mubr.bf16.mxu0 0
        %590 = vmatmul.mubr.bf16.gmra.mrb[0].mxu0 %v428
        %v591 = vpop.f32.mrb[0].mxu0
        %v592 = vadd.f32 0.0, %v591
        %v593 = vpop.f32.mrb[0].mxu0
        %v594 = vpop.f32.mrb[0].mxu0
        %v595 = vadd.f32 0.0, %v594
        %v596 = vpop.f32.mrb[0].mxu0
        %597 = vmatprep.mubr.bf16.mxu0 0
        %598 = vmatmul.mubr.bf16.gmra.mrb[0].mxu0 %v429
        %v599 = vpop.f32.mrb[0].mxu0
        %v600 = vadd.f32 0.0, %v599
        %v601 = vpop.f32.mrb[0].mxu0
        %v602 = vpop.f32.mrb[0].mxu0
        %v603 = vadd.f32 0.0, %v602
        %v604 = vpop.f32.mrb[0].mxu0
        %605 = vmatprep.mubr.bf16.mxu0 0
        %606 = vmatmul.mubr.bf16.gmra.mrb[0].mxu0 %v430
        %v607 = vpop.f32.mrb[0].mxu0
        %v608 = vadd.f32 0.0, %v607
        %v609 = vpop.f32.mrb[0].mxu0
        %v610 = vpop.f32.mrb[0].mxu0
        %v611 = vadd.f32 0.0, %v610
        %v612 = vpop.f32.mrb[0].mxu0
        %613 = vmatprep.mubr.bf16.mxu0 0
        %614 = vmatmul.mubr.bf16.gmra.mrb[0].mxu0 %v431
        %v615 = vpop.f32.mrb[0].mxu0
        %v616 = vadd.f32 0.0, %v615
        %v617 = vpop.f32.mrb[0].mxu0
        %v618 = vpop.f32.mrb[0].mxu0
        %v619 = vadd.f32 0.0, %v618
        %v620 = vpop.f32.mrb[0].mxu0
        %621 = vmatprep.mubr.bf16.mxu0 0
        %622 = vmatmul.mubr.bf16.gmra.mrb[0].mxu0 %v432
        %v623 = vpop.f32.mrb[0].mxu0
        %v624 = vadd.f32 0.0, %v623
        %v625 = vpop.f32.mrb[0].mxu0
        %v626 = vpop.f32.mrb[0].mxu0
        %v627 = vadd.f32 0.0, %v626
        %v628 = vpop.f32.mrb[0].mxu0
        %629 = vmatprep.mubr.bf16.mxu0 0
        %630 = vmatmul.mubr.bf16.gmra.mrb[0].mxu0 %v433
        %v631 = vpop.f32.mrb[0].mxu0
        %v632 = vadd.f32 0.0, %v631
        %v633 = vpop.f32.mrb[0].mxu0
        %v634 = vpop.f32.mrb[0].mxu0
        %v635 = vadd.f32 0.0, %v634
        %v636 = vpop.f32.mrb[0].mxu0
        %637 = vmatprep.mubr.bf16.mxu0 0
        %638 = vmatmul.mubr.bf16.gmra.mrb[0].mxu0 %v434
        %v639 = vpop.f32.mrb[0].mxu0
        %v640 = vadd.f32 0.0, %v639
        %v641 = vpop.f32.mrb[0].mxu0
        %v642 = vpop.f32.mrb[0].mxu0
        %v643 = vadd.f32 0.0, %v642
        %v644 = vpop.f32.mrb[0].mxu0
        %645 = vmatprep.mubr.bf16.mxu0 0
        %646 = vmatmul.mubr.bf16.gmra.mrb[0].mxu0 %v435
        %v647 = vpop.f32.mrb[0].mxu0
        %v648 = vadd.f32 0.0, %v647
        %v649 = vpop.f32.mrb[0].mxu0
        %v650 = vpop.f32.mrb[0].mxu0
        %v651 = vadd.f32 0.0, %v650
        %v652 = vpop.f32.mrb[0].mxu0
        %653 = vmatprep.mubr.bf16.mxu0 0
        %654 = vmatmul.mubr.bf16.gmra.mrb[0].mxu0 %v436
        %v655 = vpop.f32.mrb[0].mxu0
        %v656 = vadd.f32 0.0, %v655
        %v657 = vpop.f32.mrb[0].mxu0
        %v658 = vpop.f32.mrb[0].mxu0
        %v659 = vadd.f32 0.0, %v658
        %v660 = vpop.f32.mrb[0].mxu0
        %661 = vdwg.mxu0
        %v662 = vld [vmem:[%s3] sm:$0x1]
        %v663 = vstv %s257
        %v664 = vmul.f32 %v663, %v662
        %v665 = vlaneseq
        %v666 = vshrl.u32 %v665, 7
        %v667 = vsub.s32 0, %v666
        %v668 = vrot.slane %v664, %v667
        %v669 = vmul.f32 %v536, %v668
        %v670 = vmul.f32 %v539, %v668
        %v671 = vmul.f32 %v544, %v668
        %v672 = vmul.f32 %v547, %v668
        %v673 = vmul.f32 %v552, %v668
        %v674 = vmul.f32 %v555, %v668
        %v675 = vmul.f32 %v560, %v668
        %v676 = vmul.f32 %v563, %v668
        %v677 = vmul.f32 %v568, %v668
        %v678 = vmul.f32 %v571, %v668
        %v679 = vmul.f32 %v576, %v668
        %v680 = vmul.f32 %v579, %v668
        %v681 = vmul.f32 %v584, %v668
        %v682 = vmul.f32 %v587, %v668
        %v683 = vmul.f32 %v592, %v668
        %v684 = vmul.f32 %v595, %v668
        %v685 = vmul.f32 %v600, %v668
        %v686 = vmul.f32 %v603, %v668
        %v687 = vmul.f32 %v608, %v668
        %v688 = vmul.f32 %v611, %v668
        %v689 = vmul.f32 %v616, %v668
        %v690 = vmul.f32 %v619, %v668
        %v691 = vmul.f32 %v624, %v668
        %v692 = vmul.f32 %v627, %v668
        %v693 = vmul.f32 %v632, %v668
        %v694 = vmul.f32 %v635, %v668
        %v695 = vmul.f32 %v640, %v668
        %v696 = vmul.f32 %v643, %v668
        %v697 = vmul.f32 %v648, %v668
        %v698 = vmul.f32 %v651, %v668
        %v699 = vmul.f32 %v656, %v668
        %v700 = vmul.f32 %v659, %v668
        %v701 = vld [vmem:[%s3 + $0x1] sm:$0x1]
        %v702 = vlaneseq
        %v703 = vshrl.u32 %v702, 7
        %v704 = vsub.s32 0, %v703
        %v705 = vrot.slane %v701, %v704
        %v706 = vadd.f32 %v669, %v705
        %v707 = vadd.f32 %v670, %v705
        %v708 = vadd.f32 %v671, %v705
        %v709 = vadd.f32 %v672, %v705
        %v710 = vadd.f32 %v673, %v705
        %v711 = vadd.f32 %v674, %v705
        %v712 = vadd.f32 %v675, %v705
        %v713 = vadd.f32 %v676, %v705
        %v714 = vadd.f32 %v677, %v705
        %v715 = vadd.f32 %v678, %v705
        %v716 = vadd.f32 %v679, %v705
        %v717 = vadd.f32 %v680, %v705
        %v718 = vadd.f32 %v681, %v705
        %v719 = vadd.f32 %v682, %v705
        %v720 = vadd.f32 %v683, %v705
        %v721 = vadd.f32 %v684, %v705
        %v722 = vadd.f32 %v685, %v705
        %v723 = vadd.f32 %v686, %v705
        %v724 = vadd.f32 %v687, %v705
        %v725 = vadd.f32 %v688, %v705
        %v726 = vadd.f32 %v689, %v705
        %v727 = vadd.f32 %v690, %v705
        %v728 = vadd.f32 %v691, %v705
        %v729 = vadd.f32 %v692, %v705
        %v730 = vadd.f32 %v693, %v705
        %v731 = vadd.f32 %v694, %v705
        %v732 = vadd.f32 %v695, %v705
        %v733 = vadd.f32 %v696, %v705
        %v734 = vadd.f32 %v697, %v705
        %v735 = vadd.f32 %v698, %v705
        %v736 = vadd.f32 %v699, %v705
        %v737 = vadd.f32 %v700, %v705
        %v738 = vmax.f32 %v706, 0.0
        %v739 = vmax.f32 %v707, 0.0
        %v740 = vmax.f32 %v708, 0.0
        %v741 = vmax.f32 %v709, 0.0
        %v742 = vmax.f32 %v710, 0.0
        %v743 = vmax.f32 %v711, 0.0
        %v744 = vmax.f32 %v712, 0.0
        %v745 = vmax.f32 %v713, 0.0
        %v746 = vmax.f32 %v714, 0.0
        %v747 = vmax.f32 %v715, 0.0
        %v748 = vmax.f32 %v716, 0.0
        %v749 = vmax.f32 %v717, 0.0
        %v750 = vmax.f32 %v718, 0.0
        %v751 = vmax.f32 %v719, 0.0
        %v752 = vmax.f32 %v720, 0.0
        %v753 = vmax.f32 %v721, 0.0
        %v754 = vmax.f32 %v722, 0.0
        %v755 = vmax.f32 %v723, 0.0
        %v756 = vmax.f32 %v724, 0.0
        %v757 = vmax.f32 %v725, 0.0
        %v758 = vmax.f32 %v726, 0.0
        %v759 = vmax.f32 %v727, 0.0
        %v760 = vmax.f32 %v728, 0.0
        %v761 = vmax.f32 %v729, 0.0
        %v762 = vmax.f32 %v730, 0.0
        %v763 = vmax.f32 %v731, 0.0
        %v764 = vmax.f32 %v732, 0.0
        %v765 = vmax.f32 %v733, 0.0
        %v766 = vmax.f32 %v734, 0.0
        %v767 = vmax.f32 %v735, 0.0
        %v768 = vmax.f32 %v736, 0.0
        %v769 = vmax.f32 %v737, 0.0
        %770 = vst [vmem:[%s247] sm:$0xff] %v738
        %771 = vst [vmem:[%s247 + $0x8] sm:$0xff] %v739
        %772 = vst [vmem:[%s247 + $0x10] sm:$0xff] %v740
        %773 = vst [vmem:[%s247 + $0x18] sm:$0xff] %v741
        %774 = vst [vmem:[%s247 + $0x20] sm:$0xff] %v742
        %775 = vst [vmem:[%s247 + $0x28] sm:$0xff] %v743
        %776 = vst [vmem:[%s247 + $0x30] sm:$0xff] %v744
        %777 = vst [vmem:[%s247 + $0x38] sm:$0xff] %v745
        %778 = vst [vmem:[%s247 + $0x40] sm:$0xff] %v746
        %779 = vst [vmem:[%s247 + $0x48] sm:$0xff] %v747
        %780 = vst [vmem:[%s247 + $0x50] sm:$0xff] %v748
        %781 = vst [vmem:[%s247 + $0x58] sm:$0xff] %v749
        %782 = vst [vmem:[%s247 + $0x60] sm:$0xff] %v750
        %783 = vst [vmem:[%s247 + $0x68] sm:$0xff] %v751
        %784 = vst [vmem:[%s247 + $0x70] sm:$0xff] %v752
        %785 = vst [vmem:[%s247 + $0x78] sm:$0xff] %v753
        %786 = vst [vmem:[%s247 + $0x80] sm:$0xff] %v754
        %787 = vst [vmem:[%s247 + $0x88] sm:$0xff] %v755
        %788 = vst [vmem:[%s247 + $0x90] sm:$0xff] %v756
        %789 = vst [vmem:[%s247 + $0x98] sm:$0xff] %v757
        %790 = vst [vmem:[%s247 + $0xa0] sm:$0xff] %v758
        %791 = vst [vmem:[%s247 + $0xa8] sm:$0xff] %v759
        %792 = vst [vmem:[%s247 + $0xb0] sm:$0xff] %v760
        %793 = vst [vmem:[%s247 + $0xb8] sm:$0xff] %v761
        %794 = vst [vmem:[%s247 + $0xc0] sm:$0xff] %v762
        %795 = vst [vmem:[%s247 + $0xc8] sm:$0xff] %v763
        %796 = vst [vmem:[%s247 + $0xd0] sm:$0xff] %v764
        %797 = vst [vmem:[%s247 + $0xd8] sm:$0xff] %v765
        %798 = vst [vmem:[%s247 + $0xe0] sm:$0xff] %v766
        %799 = vst [vmem:[%s247 + $0xe8] sm:$0xff] %v767
        %800 = vst [vmem:[%s247 + $0xf0] sm:$0xff] %v768
        %801 = vst [vmem:[%s247 + $0xf8] sm:$0xff] %v769
        %vm802 = vcmask 64512
        %v803 = vsel %vm802, %v738, -inf
        %v804 = vsel %vm802, %v739, -inf
        %v805 = vsel %vm802, %v740, -inf
        %v806 = vsel %vm802, %v741, -inf
        %v807 = vsel %vm802, %v742, -inf
        %v808 = vmax.f32 %v803, %v807
        %v809 = vsel %vm802, %v743, -inf
        %v810 = vmax.f32 %v804, %v809
        %v811 = vsel %vm802, %v744, -inf
        %v812 = vmax.f32 %v805, %v811
        %v813 = vsel %vm802, %v745, -inf
        %v814 = vmax.f32 %v806, %v813
        %v815 = vsel %vm802, %v746, -inf
        %v816 = vmax.f32 %v808, %v815
        %v817 = vsel %vm802, %v747, -inf
        %v818 = vmax.f32 %v810, %v817
        %v819 = vsel %vm802, %v748, -inf
        %v820 = vmax.f32 %v812, %v819
        %v821 = vsel %vm802, %v749, -inf
        %v822 = vmax.f32 %v814, %v821
        %v823 = vsel %vm802, %v750, -inf
        %v824 = vmax.f32 %v816, %v823
        %v825 = vsel %vm802, %v751, -inf
        %v826 = vmax.f32 %v818, %v825
        %v827 = vsel %vm802, %v752, -inf
        %v828 = vmax.f32 %v820, %v827
        %v829 = vsel %vm802, %v753, -inf
        %v830 = vmax.f32 %v822, %v829
        %v831 = vsel %vm802, %v754, -inf
        %v832 = vmax.f32 %v824, %v831
        %v833 = vsel %vm802, %v755, -inf
        %v834 = vmax.f32 %v826, %v833
        %v835 = vsel %vm802, %v756, -inf
        %v836 = vmax.f32 %v828, %v835
        %v837 = vsel %vm802, %v757, -inf
        %v838 = vmax.f32 %v830, %v837
        %v839 = vsel %vm802, %v758, -inf
        %v840 = vmax.f32 %v832, %v839
        %v841 = vsel %vm802, %v759, -inf
        %v842 = vmax.f32 %v834, %v841
        %v843 = vsel %vm802, %v760, -inf
        %v844 = vmax.f32 %v836, %v843
        %v845 = vsel %vm802, %v761, -inf
        %v846 = vmax.f32 %v838, %v845
        %v847 = vsel %vm802, %v762, -inf
        %v848 = vmax.f32 %v840, %v847
        %v849 = vsel %vm802, %v763, -inf
        %v850 = vmax.f32 %v842, %v849
        %v851 = vsel %vm802, %v764, -inf
        %v852 = vmax.f32 %v844, %v851
        %v853 = vsel %vm802, %v765, -inf
        %v854 = vmax.f32 %v846, %v853
        %v855 = vsel %vm802, %v766, -inf
        %v856 = vmax.f32 %v848, %v855
        %v857 = vsel %vm802, %v767, -inf
        %v858 = vmax.f32 %v850, %v857
        %v859 = vsel %vm802, %v768, -inf
        %v860 = vmax.f32 %v852, %v859
        %v861 = vsel %vm802, %v769, -inf
        %v862 = vmax.f32 %v854, %v861
        %v863 = vmax.f32 %v856, %v858
        %v864 = vmax.f32 %v860, %v862
        %v865 = vmax.f32 %v863, %v864
        %v866 = vrot.slane %v865, 4
        %v867 = vmax.f32 %v865, %v866
        %v868 = vrot.slane %v867, 2
        %v869 = vmax.f32 %v867, %v868
        %v870 = vrot.slane %v869, 1
        %v871 = vmax.f32 %v869, %v870
        %v872 = vsel %vm802, %v871, -inf
        %873 = vmax.xlane.f32.xlu0 %v872
        %v874 = vpop.xlane.xlu0 %873
        %v875 = vsel %vm802, %v738, inf
        %v876 = vsel %vm802, %v739, inf
        %v877 = vsel %vm802, %v740, inf
        %v878 = vsel %vm802, %v741, inf
        %v879 = vsel %vm802, %v742, inf
        %v880 = vmin.f32 %v875, %v879
        %v881 = vsel %vm802, %v743, inf
        %v882 = vmin.f32 %v876, %v881
        %v883 = vsel %vm802, %v744, inf
        %v884 = vmin.f32 %v877, %v883
        %v885 = vsel %vm802, %v745, inf
        %v886 = vmin.f32 %v878, %v885
        %v887 = vsel %vm802, %v746, inf
        %v888 = vmin.f32 %v880, %v887
        %v889 = vsel %vm802, %v747, inf
        %v890 = vmin.f32 %v882, %v889
        %v891 = vsel %vm802, %v748, inf
        %v892 = vmin.f32 %v884, %v891
        %v893 = vsel %vm802, %v749, inf
        %v894 = vmin.f32 %v886, %v893
        %v895 = vsel %vm802, %v750, inf
        %v896 = vmin.f32 %v888, %v895
        %v897 = vsel %vm802, %v751, inf
        %v898 = vmin.f32 %v890, %v897
        %v899 = vsel %vm802, %v752, inf
        %v900 = vmin.f32 %v892, %v899
        %v901 = vsel %vm802, %v753, inf
        %v902 = vmin.f32 %v894, %v901
        %v903 = vsel %vm802, %v754, inf
        %v904 = vmin.f32 %v896, %v903
        %v905 = vsel %vm802, %v755, inf
        %v906 = vmin.f32 %v898, %v905
        %v907 = vsel %vm802, %v756, inf
        %v908 = vmin.f32 %v900, %v907
        %v909 = vsel %vm802, %v757, inf
        %v910 = vmin.f32 %v902, %v909
        %v911 = vsel %vm802, %v758, inf
        %v912 = vmin.f32 %v904, %v911
        %v913 = vsel %vm802, %v759, inf
        %v914 = vmin.f32 %v906, %v913
        %v915 = vsel %vm802, %v760, inf
        %v916 = vmin.f32 %v908, %v915
        %v917 = vsel %vm802, %v761, inf
        %v918 = vmin.f32 %v910, %v917
        %v919 = vsel %vm802, %v762, inf
        %v920 = vmin.f32 %v912, %v919
        %v921 = vsel %vm802, %v763, inf
        %v922 = vmin.f32 %v914, %v921
        %v923 = vsel %vm802, %v764, inf
        %v924 = vmin.f32 %v916, %v923
        %v925 = vsel %vm802, %v765, inf
        %v926 = vmin.f32 %v918, %v925
        %v927 = vsel %vm802, %v766, inf
        %v928 = vmin.f32 %v920, %v927
        %v929 = vsel %vm802, %v767, inf
        %v930 = vmin.f32 %v922, %v929
        %v931 = vsel %vm802, %v768, inf
        %v932 = vmin.f32 %v924, %v931
        %v933 = vsel %vm802, %v769, inf
        %v934 = vmin.f32 %v926, %v933
        %v935 = vmin.f32 %v928, %v930
        %v936 = vmin.f32 %v932, %v934
        %v937 = vmin.f32 %v935, %v936
        %v938 = vrot.slane %v937, 4
        %v939 = vmin.f32 %v937, %v938
        %v940 = vrot.slane %v939, 2
        %v941 = vmin.f32 %v939, %v940
        %v942 = vrot.slane %v941, 1
        %v943 = vmin.f32 %v941, %v942
        %v944 = vsel %vm802, %v943, inf
        %945 = vmin.xlane.f32.xlu0 %v944
        %v946 = vpop.xlane.xlu0 %945
        %947 = vst [vmem:[%s252] sm:$0xf] %v874
        %948 = vst [vmem:[%s252 + $0x4] sm:$0xf] %v946
        %s949 = smul.u32 32, %s18
        %p950 = scmp.lt.s32.totalorder %s949, 63
        %s951 = scalar_select %p950, %s949, 63
        %s952 = smul.addr %s951, 8
        %s953 = scalar_lea.vmem %s4, %s952
        %p954 = scmp.lt.s32.totalorder %s18, 1
        %s955 = scalar_select %p954, %s18, 1
        %s956 = smul.addr %s955, 8
        %s957 = scalar_lea.vmem %s5, %s956
        // Predicated region
        $region41: #{quant_model_forward.2} parent=35 // pred_check
          %p958 = pneg %p125
        $region42: #{quant_model_forward.2} parent=35 // pred_check_branch
          %960 = sbr.rel (%p958) target = $region44
        $region43: #{quant_model_forward.2} parent=35 // pred_region
          %s961 = smul.u32 32, %s18
        $region44: #{quant_model_forward.2} parent=35 // pred_fallthru
          _
        // Predicated region
        $region45: #{quant_model_forward.2} parent=35 // pred_check
          %p962 = pneg %p151
        $region46: #{quant_model_forward.2} parent=35 // pred_check_branch
          %964 = sbr.rel (%p962) target = $region48
        $region47: #{quant_model_forward.2} parent=35 // pred_region
          _
        $region48: #{quant_model_forward.2} parent=35 // pred_fallthru
          _
      $region36: #{quant_model_forward.2} parent=5 // pred_fallthru
        _
      %p965 = scmp.le.s32.totalorder 2, %s13
      // Predicated region
      $region49: #{quant_model_forward.2} parent=5 // pred_check
        %p966 = pneg %p965
      $region50: #{quant_model_forward.2} parent=5 // pred_check_branch
        %968 = sbr.rel (%p966) target = $region52
      $region51: #{quant_model_forward.2} parent=5 // pred_region
        %s969 = ssub.s32 %s13, 2
        // Predicated region
        $region53: #{quant_model_forward.2} parent=51 // pred_check
          %p970 = pneg %p131
        $region54: #{quant_model_forward.2} parent=51 // pred_check_branch
          %972 = sbr.rel (%p970) target = $region56
        $region55: #{quant_model_forward.2} parent=51 // pred_region
          %s973 = smul.u32 32, %s19
          %p974 = scmp.lt.s32.totalorder %s973, 63
          %s975 = scalar_select %p974, %s973, 63
          %s976 = smul.addr %s975, 8
          %s977 = scalar_lea.vmem %s4, %s976
        $region56: #{quant_model_forward.2} parent=51 // pred_fallthru
          _
        // Predicated region
        $region57: #{quant_model_forward.2} parent=51 // pred_check
          %p978 = pneg %p157
        $region58: #{quant_model_forward.2} parent=51 // pred_check_branch
          %980 = sbr.rel (%p978) target = $region60
        $region59: #{quant_model_forward.2} parent=51 // pred_region
          %p981 = scmp.lt.s32.totalorder %s19, 1
          %s982 = scalar_select %p981, %s19, 1
          %s983 = smul.addr %s982, 8
          %s984 = scalar_lea.vmem %s5, %s983
        $region60: #{quant_model_forward.2} parent=51 // pred_fallthru
          _
      $region52: #{quant_model_forward.2} parent=5 // pred_fallthru
        _
    $region6: #{quant_model_forward.2} parent=1 // loop_footer
      %s17 = sadd.s32 1, %s13
    $region7: #{quant_model_forward.2} parent=1 // loop_footer_branch
      %12 = sbr.rel target = $region3
    $region8: #{quant_model_forward.2} parent=1 // loop_exit
      _
    %985 = vsyncpa [#allocation3], 1
    %s986 = scalar_lea.sflag [#allocation3], 1
    %987 = vsyncpa %s986, 1

// kernel: quant_model_forward.3
$region0: #{quant_model_forward.3}
  #allocation0 [shape = 'u32[]', space=smem, size = 0x4, offset = 0x4, fixed_abs, tag = 'smem constant byte address 0x4 - core index']
  #allocation1 [shape = 'u32[144,128]{1,0:T(1,128)}', space=vmem, size = 0x12000, scoped, tag = 'internal scratch']
  %s0 = inlined_call_operand.vmem [shape: f32[4], index: 0, kind: input, shape index: {}]
  %s1 = inlined_call_operand.vmem [shape: f32[2,2048], index: 1, kind: input, shape index: {}]
  %s2 = inlined_call_operand.vmem [shape: bf16[2048,128], index: 2, kind: input, shape index: {}]
  %s3 = inlined_call_operand.vmem [shape: f32[2,128], index: 3, kind: input, shape index: {}]
  %s4 = inlined_call_operand.hbm [shape: f32[2,128], index: 4, kind: output, shape index: {}]
  %s5 = sld [smem:[#allocation0]]
  $region30: #{quant_model_forward.3} parent=0
    _
  %s7 = ssub.s32 1, %s5
  %s8 = scalar_select 0, %s7, %s5
  $region1: #{quant_model_forward.3} parent=0
    #allocation2 [shape = 'u8[512]{0}', space=smem, size = 0x200, scoped, tag = 'input window, operand 0, single buffered']
    #allocation3 [shape = 's32[1]{0}', space=sflag, size = 0x4, scoped, tag = 'scoped memory for quant_model_forward.3']
    #allocation4 [shape = 's32[1]{0}', space=sflag, size = 0x4, scoped, tag = 'scoped memory for quant_model_forward.3']
    #allocation5 [shape = 'u8[1024]{0}', space=vmem, size = 0x400, scoped, tag = 'output window, operand 0, single buffered']
    %9 = vsyncpa [#allocation4], 0
    %10 = vsyncpa [#allocation3], 0
    // Predicated region
    $region2: #{quant_model_forward.3} parent=1 // pred_check
      _
    $region3: #{quant_model_forward.3} parent=1 // pred_check_branch
      %12 = sbr.rel (0) target = $region5
    $region4: #{quant_model_forward.3} parent=1 // pred_region
      %s14 = ssub.s32 16, 16
      %15 = vsyncadd [#allocation4], %s14
      %s17 = sshll.u32 %s0, 4
      %s18 = int_to_ptr.vmem [resolvable:$true] %s17
      %20 = dma.vmem_to_smem %s18, 16, [#allocation2], [#allocation4]
    $region5: #{quant_model_forward.3} parent=1 // pred_fallthru
      _
    // Predicated region
    $region6: #{quant_model_forward.3} parent=1 // pred_check
      _
    $region7: #{quant_model_forward.3} parent=1 // pred_check_branch
      %22 = sbr.rel (0) target = $region9
    $region8: #{quant_model_forward.3} parent=1 // pred_region
      _
    $region9: #{quant_model_forward.3} parent=1 // pred_fallthru
      _
    // Predicated region
    $region10: #{quant_model_forward.3} parent=1 // pred_check
      _
    $region11: #{quant_model_forward.3} parent=1 // pred_check_branch
      %24 = sbr.rel (0) target = $region13
    $region12: #{quant_model_forward.3} parent=1 // pred_region
      _
    $region13: #{quant_model_forward.3} parent=1 // pred_fallthru
      _
    // Predicated region
    $region14: #{quant_model_forward.3} parent=1 // pred_check
      _
    $region15: #{quant_model_forward.3} parent=1 // pred_check_branch
      %26 = sbr.rel (0) target = $region17
    $region16: #{quant_model_forward.3} parent=1 // pred_region
      _
    $region17: #{quant_model_forward.3} parent=1 // pred_fallthru
      _
    // Predicated region
    $region18: #{quant_model_forward.3} parent=1 // pred_check
      _
    $region19: #{quant_model_forward.3} parent=1 // pred_check_branch
      %28 = sbr.rel (0) target = $region21
    $region20: #{quant_model_forward.3} parent=1 // pred_region
      %29 = dma.done [#allocation4], 16
    $region21: #{quant_model_forward.3} parent=1 // pred_fallthru
      _
    %30 = sfence
    %s32 = sld [smem:[#allocation2]]
    %s33 = sld [smem:[#allocation2 + $0x1]]
    %s34 = sld [smem:[#allocation2 + $0x2]]
    %s35 = sld [smem:[#allocation2 + $0x3]]
    %v36 = vld [vmem:[%s1] sm:$0xff]
    %v37 = vld [vmem:[%s1 + $0x8] sm:$0xff]
    %v38 = vld [vmem:[%s1 + $0x10] sm:$0xff]
    %v39 = vld [vmem:[%s1 + $0x18] sm:$0xff]
    %v40 = vstv %s32
    %v41 = vmul.f32 %v36, %v40
    %v42 = vmul.f32 %v37, %v40
    %v43 = vmul.f32 %v38, %v40
    %v44 = vmul.f32 %v39, %v40
    %v45 = vround.ne.pseudo %v41
    %v46 = vround.ne.pseudo %v42
    %v47 = vround.ne.pseudo %v43
    %v48 = vround.ne.pseudo %v44
    %v49 = vstv %s33
    %v50 = vmax.f32 %v49, %v45
    %v51 = vmax.f32 %v49, %v46
    %v52 = vmax.f32 %v49, %v47
    %v53 = vmax.f32 %v49, %v48
    %v54 = vstv %s34
    %v55 = vmin.f32 %v54, %v50
    %v56 = vmin.f32 %v54, %v51
    %v57 = vmin.f32 %v54, %v52
    %v58 = vmin.f32 %v54, %v53
    %v63 = vcombine.high %v55, %v55
    %v65 = vunpack.c.l.s4 1983009808
    %v66 = vunpack.c.0.s8 %v65
    %v67 = vlaneseq
    %v68 = vshrl.u32 %v67, 7
    %v69 = vsub.s32 %v66, %v68
    %v70 = vrot.slane %v55, %v69
    %v72 = vunpack.c.l.s4 1983009808
    %v73 = vunpack.c.0.s8 %v72
    %v74 = vlaneseq
    %v75 = vshrl.u32 %v74, 7
    %v76 = vsub.s32 %v73, %v75
    %v77 = vrot.slane %v63, %v76
    %v78 = vcombine.high %v70, %v70
    %v79 = vcombine.high %v77, %v77
    %v80 = vcombine.high %v56, %v56
    %v82 = vunpack.c.l.s4 1983009808
    %v83 = vunpack.c.0.s8 %v82
    %v84 = vlaneseq
    %v85 = vshrl.u32 %v84, 7
    %v86 = vsub.s32 %v83, %v85
    %v87 = vrot.slane %v56, %v86
    %v89 = vunpack.c.l.s4 1983009808
    %v90 = vunpack.c.0.s8 %v89
    %v91 = vlaneseq
    %v92 = vshrl.u32 %v91, 7
    %v93 = vsub.s32 %v90, %v92
    %v94 = vrot.slane %v80, %v93
    %v95 = vcombine.high %v87, %v87
    %v96 = vcombine.high %v94, %v94
    %v97 = vcombine.high %v57, %v57
    %v99 = vunpack.c.l.s4 1983009808
    %v100 = vunpack.c.0.s8 %v99
    %v101 = vlaneseq
    %v102 = vshrl.u32 %v101, 7
    %v103 = vsub.s32 %v100, %v102
    %v104 = vrot.slane %v57, %v103
    %v106 = vunpack.c.l.s4 1983009808
    %v107 = vunpack.c.0.s8 %v106
    %v108 = vlaneseq
    %v109 = vshrl.u32 %v108, 7
    %v110 = vsub.s32 %v107, %v109
    %v111 = vrot.slane %v97, %v110
    %v112 = vcombine.high %v104, %v104
    %v113 = vcombine.high %v111, %v111
    %v114 = vcombine.high %v58, %v58
    %v116 = vunpack.c.l.s4 1983009808
    %v117 = vunpack.c.0.s8 %v116
    %v118 = vlaneseq
    %v119 = vshrl.u32 %v118, 7
    %v120 = vsub.s32 %v117, %v119
    %v121 = vrot.slane %v58, %v120
    %v123 = vunpack.c.l.s4 1983009808
    %v124 = vunpack.c.0.s8 %v123
    %v125 = vlaneseq
    %v126 = vshrl.u32 %v125, 7
    %v127 = vsub.s32 %v124, %v126
    %v128 = vrot.slane %v114, %v127
    %v129 = vcombine.high %v121, %v121
    %v130 = vcombine.high %v128, %v128
    %v147 = vpack.c.bf16 %v70, %v70
    %v148 = vpack.c.bf16 %v78, %v78
    %v149 = vpack.c.bf16 %v77, %v77
    %v150 = vpack.c.bf16 %v79, %v79
    %v151 = vpack.c.bf16 %v87, %v87
    %v152 = vpack.c.bf16 %v95, %v95
    %v153 = vpack.c.bf16 %v94, %v94
    %v154 = vpack.c.bf16 %v96, %v96
    %v155 = vpack.c.bf16 %v104, %v104
    %v156 = vpack.c.bf16 %v112, %v112
    %v157 = vpack.c.bf16 %v111, %v111
    %v158 = vpack.c.bf16 %v113, %v113
    %v159 = vpack.c.bf16 %v121, %v121
    %v160 = vpack.c.bf16 %v129, %v129
    %v161 = vpack.c.bf16 %v128, %v128
    %v162 = vpack.c.bf16 %v130, %v130
    %v163 = vld [vmem:[%s2] sm:$0xf]
    %v164 = vld [vmem:[%s2 + $0x4] sm:$0xf]
    %v165 = vld [vmem:[%s2 + $0x8] sm:$0xf]
    %v166 = vld [vmem:[%s2 + $0xc] sm:$0xf]
    %v167 = vld [vmem:[%s2 + $0x10] sm:$0xf]
    %v168 = vld [vmem:[%s2 + $0x14] sm:$0xf]
    %v169 = vld [vmem:[%s2 + $0x18] sm:$0xf]
    %v170 = vld [vmem:[%s2 + $0x1c] sm:$0xf]
    %v171 = vld [vmem:[%s2 + $0x20] sm:$0xf]
    %v172 = vld [vmem:[%s2 + $0x24] sm:$0xf]
    %v173 = vld [vmem:[%s2 + $0x28] sm:$0xf]
    %v174 = vld [vmem:[%s2 + $0x2c] sm:$0xf]
    %v175 = vld [vmem:[%s2 + $0x30] sm:$0xf]
    %v176 = vld [vmem:[%s2 + $0x34] sm:$0xf]
    %v177 = vld [vmem:[%s2 + $0x38] sm:$0xf]
    %v178 = vld [vmem:[%s2 + $0x3c] sm:$0xf]
    %v179 = vld [vmem:[%s2 + $0x40] sm:$0xf]
    %v180 = vld [vmem:[%s2 + $0x44] sm:$0xf]
    %v181 = vld [vmem:[%s2 + $0x48] sm:$0xf]
    %v182 = vld [vmem:[%s2 + $0x4c] sm:$0xf]
    %v183 = vld [vmem:[%s2 + $0x50] sm:$0xf]
    %v184 = vld [vmem:[%s2 + $0x54] sm:$0xf]
    %v185 = vld [vmem:[%s2 + $0x58] sm:$0xf]
    %v186 = vld [vmem:[%s2 + $0x5c] sm:$0xf]
    %v187 = vld [vmem:[%s2 + $0x60] sm:$0xf]
    %v188 = vld [vmem:[%s2 + $0x64] sm:$0xf]
    %v189 = vld [vmem:[%s2 + $0x68] sm:$0xf]
    %v190 = vld [vmem:[%s2 + $0x6c] sm:$0xf]
    %v191 = vld [vmem:[%s2 + $0x70] sm:$0xf]
    %v192 = vld [vmem:[%s2 + $0x74] sm:$0xf]
    %v193 = vld [vmem:[%s2 + $0x78] sm:$0xf]
    %v194 = vld [vmem:[%s2 + $0x7c] sm:$0xf]
    %v195 = vld [vmem:[%s2 + $0x80] sm:$0xf]
    %v196 = vld [vmem:[%s2 + $0x84] sm:$0xf]
    %v197 = vld [vmem:[%s2 + $0x88] sm:$0xf]
    %v198 = vld [vmem:[%s2 + $0x8c] sm:$0xf]
    %v199 = vld [vmem:[%s2 + $0x90] sm:$0xf]
    %v200 = vld [vmem:[%s2 + $0x94] sm:$0xf]
    %v201 = vld [vmem:[%s2 + $0x98] sm:$0xf]
    %v202 = vld [vmem:[%s2 + $0x9c] sm:$0xf]
    %v203 = vld [vmem:[%s2 + $0xa0] sm:$0xf]
    %v204 = vld [vmem:[%s2 + $0xa4] sm:$0xf]
    %v205 = vld [vmem:[%s2 + $0xa8] sm:$0xf]
    %v206 = vld [vmem:[%s2 + $0xac] sm:$0xf]
    %v207 = vld [vmem:[%s2 + $0xb0] sm:$0xf]
    %v208 = vld [vmem:[%s2 + $0xb4] sm:$0xf]
    %v209 = vld [vmem:[%s2 + $0xb8] sm:$0xf]
    %v210 = vld [vmem:[%s2 + $0xbc] sm:$0xf]
    %v211 = vld [vmem:[%s2 + $0xc0] sm:$0xf]
    %v212 = vld [vmem:[%s2 + $0xc4] sm:$0xf]
    %v213 = vld [vmem:[%s2 + $0xc8] sm:$0xf]
    %v214 = vld [vmem:[%s2 + $0xcc] sm:$0xf]
    %v215 = vld [vmem:[%s2 + $0xd0] sm:$0xf]
    %v216 = vld [vmem:[%s2 + $0xd4] sm:$0xf]
    %v217 = vld [vmem:[%s2 + $0xd8] sm:$0xf]
    %v218 = vld [vmem:[%s2 + $0xdc] sm:$0xf]
    %v219 = vld [vmem:[%s2 + $0xe0] sm:$0xf]
    %v220 = vld [vmem:[%s2 + $0xe4] sm:$0xf]
    %v221 = vld [vmem:[%s2 + $0xe8] sm:$0xf]
    %v222 = vld [vmem:[%s2 + $0xec] sm:$0xf]
    %v223 = vld [vmem:[%s2 + $0xf0] sm:$0xf]
    %v224 = vld [vmem:[%s2 + $0xf4] sm:$0xf]
    %v225 = vld [vmem:[%s2 + $0xf8] sm:$0xf]
    %v226 = vld [vmem:[%s2 + $0xfc] sm:$0xf]
    %v227 = vld [vmem:[%s2 + $0x100] sm:$0xf]
    %v228 = vld [vmem:[%s2 + $0x104] sm:$0xf]
    %v229 = vld [vmem:[%s2 + $0x108] sm:$0xf]
    %v230 = vld [vmem:[%s2 + $0x10c] sm:$0xf]
    %v231 = vld [vmem:[%s2 + $0x110] sm:$0xf]
    %v232 = vld [vmem:[%s2 + $0x114] sm:$0xf]
    %v233 = vld [vmem:[%s2 + $0x118] sm:$0xf]
    %v234 = vld [vmem:[%s2 + $0x11c] sm:$0xf]
    %v235 = vld [vmem:[%s2 + $0x120] sm:$0xf]
    %v236 = vld [vmem:[%s2 + $0x124] sm:$0xf]
    %v237 = vld [vmem:[%s2 + $0x128] sm:$0xf]
    %v238 = vld [vmem:[%s2 + $0x12c] sm:$0xf]
    %v239 = vld [vmem:[%s2 + $0x130] sm:$0xf]
    %v240 = vld [vmem:[%s2 + $0x134] sm:$0xf]
    %v241 = vld [vmem:[%s2 + $0x138] sm:$0xf]
    %v242 = vld [vmem:[%s2 + $0x13c] sm:$0xf]
    %v243 = vld [vmem:[%s2 + $0x140] sm:$0xf]
    %v244 = vld [vmem:[%s2 + $0x144] sm:$0xf]
    %v245 = vld [vmem:[%s2 + $0x148] sm:$0xf]
    %v246 = vld [vmem:[%s2 + $0x14c] sm:$0xf]
    %v247 = vld [vmem:[%s2 + $0x150] sm:$0xf]
    %v248 = vld [vmem:[%s2 + $0x154] sm:$0xf]
    %v249 = vld [vmem:[%s2 + $0x158] sm:$0xf]
    %v250 = vld [vmem:[%s2 + $0x15c] sm:$0xf]
    %v251 = vld [vmem:[%s2 + $0x160] sm:$0xf]
    %v252 = vld [vmem:[%s2 + $0x164] sm:$0xf]
    %v253 = vld [vmem:[%s2 + $0x168] sm:$0xf]
    %v254 = vld [vmem:[%s2 + $0x16c] sm:$0xf]
    %v255 = vld [vmem:[%s2 + $0x170] sm:$0xf]
    %v256 = vld [vmem:[%s2 + $0x174] sm:$0xf]
    %v257 = vld [vmem:[%s2 + $0x178] sm:$0xf]
    %v258 = vld [vmem:[%s2 + $0x17c] sm:$0xf]
    %v259 = vld [vmem:[%s2 + $0x180] sm:$0xf]
    %v260 = vld [vmem:[%s2 + $0x184] sm:$0xf]
    %v261 = vld [vmem:[%s2 + $0x188] sm:$0xf]
    %v262 = vld [vmem:[%s2 + $0x18c] sm:$0xf]
    %v263 = vld [vmem:[%s2 + $0x190] sm:$0xf]
    %v264 = vld [vmem:[%s2 + $0x194] sm:$0xf]
    %v265 = vld [vmem:[%s2 + $0x198] sm:$0xf]
    %v266 = vld [vmem:[%s2 + $0x19c] sm:$0xf]
    %v267 = vld [vmem:[%s2 + $0x1a0] sm:$0xf]
    %v268 = vld [vmem:[%s2 + $0x1a4] sm:$0xf]
    %v269 = vld [vmem:[%s2 + $0x1a8] sm:$0xf]
    %v270 = vld [vmem:[%s2 + $0x1ac] sm:$0xf]
    %v271 = vld [vmem:[%s2 + $0x1b0] sm:$0xf]
    %v272 = vld [vmem:[%s2 + $0x1b4] sm:$0xf]
    %v273 = vld [vmem:[%s2 + $0x1b8] sm:$0xf]
    %v274 = vld [vmem:[%s2 + $0x1bc] sm:$0xf]
    %v275 = vld [vmem:[%s2 + $0x1c0] sm:$0xf]
    %v276 = vld [vmem:[%s2 + $0x1c4] sm:$0xf]
    %v277 = vld [vmem:[%s2 + $0x1c8] sm:$0xf]
    %v278 = vld [vmem:[%s2 + $0x1cc] sm:$0xf]
    %v279 = vld [vmem:[%s2 + $0x1d0] sm:$0xf]
    %v280 = vld [vmem:[%s2 + $0x1d4] sm:$0xf]
    %v281 = vld [vmem:[%s2 + $0x1d8] sm:$0xf]
    %v282 = vld [vmem:[%s2 + $0x1dc] sm:$0xf]
    %v283 = vld [vmem:[%s2 + $0x1e0] sm:$0xf]
    %v284 = vld [vmem:[%s2 + $0x1e4] sm:$0xf]
    %v285 = vld [vmem:[%s2 + $0x1e8] sm:$0xf]
    %v286 = vld [vmem:[%s2 + $0x1ec] sm:$0xf]
    %v287 = vld [vmem:[%s2 + $0x1f0] sm:$0xf]
    %v288 = vld [vmem:[%s2 + $0x1f4] sm:$0xf]
    %v289 = vld [vmem:[%s2 + $0x1f8] sm:$0xf]
    %v290 = vld [vmem:[%s2 + $0x1fc] sm:$0xf]
    %v291 = vld [vmem:[%s2 + $0x200] sm:$0xf]
    %v292 = vld [vmem:[%s2 + $0x204] sm:$0xf]
    %v293 = vld [vmem:[%s2 + $0x208] sm:$0xf]
    %v294 = vld [vmem:[%s2 + $0x20c] sm:$0xf]
    %v295 = vld [vmem:[%s2 + $0x210] sm:$0xf]
    %v296 = vld [vmem:[%s2 + $0x214] sm:$0xf]
    %v297 = vld [vmem:[%s2 + $0x218] sm:$0xf]
    %v298 = vld [vmem:[%s2 + $0x21c] sm:$0xf]
    %v299 = vld [vmem:[%s2 + $0x220] sm:$0xf]
    %v300 = vld [vmem:[%s2 + $0x224] sm:$0xf]
    %v301 = vld [vmem:[%s2 + $0x228] sm:$0xf]
    %v302 = vld [vmem:[%s2 + $0x22c] sm:$0xf]
    %v303 = vld [vmem:[%s2 + $0x230] sm:$0xf]
    %v304 = vld [vmem:[%s2 + $0x234] sm:$0xf]
    %v305 = vld [vmem:[%s2 + $0x238] sm:$0xf]
    %v306 = vld [vmem:[%s2 + $0x23c] sm:$0xf]
    %v307 = vld [vmem:[%s2 + $0x240] sm:$0xf]
    %v308 = vld [vmem:[%s2 + $0x244] sm:$0xf]
    %v309 = vld [vmem:[%s2 + $0x248] sm:$0xf]
    %v310 = vld [vmem:[%s2 + $0x24c] sm:$0xf]
    %v311 = vld [vmem:[%s2 + $0x250] sm:$0xf]
    %v312 = vld [vmem:[%s2 + $0x254] sm:$0xf]
    %v313 = vld [vmem:[%s2 + $0x258] sm:$0xf]
    %v314 = vld [vmem:[%s2 + $0x25c] sm:$0xf]
    %v315 = vld [vmem:[%s2 + $0x260] sm:$0xf]
    %v316 = vld [vmem:[%s2 + $0x264] sm:$0xf]
    %v317 = vld [vmem:[%s2 + $0x268] sm:$0xf]
    %v318 = vld [vmem:[%s2 + $0x26c] sm:$0xf]
    %v319 = vld [vmem:[%s2 + $0x270] sm:$0xf]
    %v320 = vld [vmem:[%s2 + $0x274] sm:$0xf]
    %v321 = vld [vmem:[%s2 + $0x278] sm:$0xf]
    %v322 = vld [vmem:[%s2 + $0x27c] sm:$0xf]
    %v323 = vld [vmem:[%s2 + $0x280] sm:$0xf]
    %v324 = vld [vmem:[%s2 + $0x284] sm:$0xf]
    %v325 = vld [vmem:[%s2 + $0x288] sm:$0xf]
    %v326 = vld [vmem:[%s2 + $0x28c] sm:$0xf]
    %v327 = vld [vmem:[%s2 + $0x290] sm:$0xf]
    %v328 = vld [vmem:[%s2 + $0x294] sm:$0xf]
    %v329 = vld [vmem:[%s2 + $0x298] sm:$0xf]
    %v330 = vld [vmem:[%s2 + $0x29c] sm:$0xf]
    %v331 = vld [vmem:[%s2 + $0x2a0] sm:$0xf]
    %v332 = vld [vmem:[%s2 + $0x2a4] sm:$0xf]
    %v333 = vld [vmem:[%s2 + $0x2a8] sm:$0xf]
    %v334 = vld [vmem:[%s2 + $0x2ac] sm:$0xf]
    %v335 = vld [vmem:[%s2 + $0x2b0] sm:$0xf]
    %v336 = vld [vmem:[%s2 + $0x2b4] sm:$0xf]
    %v337 = vld [vmem:[%s2 + $0x2b8] sm:$0xf]
    %v338 = vld [vmem:[%s2 + $0x2bc] sm:$0xf]
    %v339 = vld [vmem:[%s2 + $0x2c0] sm:$0xf]
    %v340 = vld [vmem:[%s2 + $0x2c4] sm:$0xf]
    %v341 = vld [vmem:[%s2 + $0x2c8] sm:$0xf]
    %v342 = vld [vmem:[%s2 + $0x2cc] sm:$0xf]
    %v343 = vld [vmem:[%s2 + $0x2d0] sm:$0xf]
    %v344 = vld [vmem:[%s2 + $0x2d4] sm:$0xf]
    %v345 = vld [vmem:[%s2 + $0x2d8] sm:$0xf]
    %v346 = vld [vmem:[%s2 + $0x2dc] sm:$0xf]
    %v347 = vld [vmem:[%s2 + $0x2e0] sm:$0xf]
    %v348 = vld [vmem:[%s2 + $0x2e4] sm:$0xf]
    %v349 = vld [vmem:[%s2 + $0x2e8] sm:$0xf]
    %v350 = vld [vmem:[%s2 + $0x2ec] sm:$0xf]
    %v351 = vld [vmem:[%s2 + $0x2f0] sm:$0xf]
    %v352 = vld [vmem:[%s2 + $0x2f4] sm:$0xf]
    %v353 = vld [vmem:[%s2 + $0x2f8] sm:$0xf]
    %v354 = vld [vmem:[%s2 + $0x2fc] sm:$0xf]
    %v355 = vld [vmem:[%s2 + $0x300] sm:$0xf]
    %v356 = vld [vmem:[%s2 + $0x304] sm:$0xf]
    %v357 = vld [vmem:[%s2 + $0x308] sm:$0xf]
    %v358 = vld [vmem:[%s2 + $0x30c] sm:$0xf]
    %v359 = vld [vmem:[%s2 + $0x310] sm:$0xf]
    %v360 = vld [vmem:[%s2 + $0x314] sm:$0xf]
    %v361 = vld [vmem:[%s2 + $0x318] sm:$0xf]
    %v362 = vld [vmem:[%s2 + $0x31c] sm:$0xf]
    %v363 = vld [vmem:[%s2 + $0x320] sm:$0xf]
    %v364 = vld [vmem:[%s2 + $0x324] sm:$0xf]
    %v365 = vld [vmem:[%s2 + $0x328] sm:$0xf]
    %v366 = vld [vmem:[%s2 + $0x32c] sm:$0xf]
    %v367 = vld [vmem:[%s2 + $0x330] sm:$0xf]
    %v368 = vld [vmem:[%s2 + $0x334] sm:$0xf]
    %v369 = vld [vmem:[%s2 + $0x338] sm:$0xf]
    %v370 = vld [vmem:[%s2 + $0x33c] sm:$0xf]
    %v371 = vld [vmem:[%s2 + $0x340] sm:$0xf]
    %v372 = vld [vmem:[%s2 + $0x344] sm:$0xf]
    %v373 = vld [vmem:[%s2 + $0x348] sm:$0xf]
    %v374 = vld [vmem:[%s2 + $0x34c] sm:$0xf]
    %v375 = vld [vmem:[%s2 + $0x350] sm:$0xf]
    %v376 = vld [vmem:[%s2 + $0x354] sm:$0xf]
    %v377 = vld [vmem:[%s2 + $0x358] sm:$0xf]
    %v378 = vld [vmem:[%s2 + $0x35c] sm:$0xf]
    %v379 = vld [vmem:[%s2 + $0x360] sm:$0xf]
    %v380 = vld [vmem:[%s2 + $0x364] sm:$0xf]
    %v381 = vld [vmem:[%s2 + $0x368] sm:$0xf]
    %v382 = vld [vmem:[%s2 + $0x36c] sm:$0xf]
    %v383 = vld [vmem:[%s2 + $0x370] sm:$0xf]
    %v384 = vld [vmem:[%s2 + $0x374] sm:$0xf]
    %v385 = vld [vmem:[%s2 + $0x378] sm:$0xf]
    %v386 = vld [vmem:[%s2 + $0x37c] sm:$0xf]
    %v387 = vld [vmem:[%s2 + $0x380] sm:$0xf]
    %v388 = vld [vmem:[%s2 + $0x384] sm:$0xf]
    %v389 = vld [vmem:[%s2 + $0x388] sm:$0xf]
    %v390 = vld [vmem:[%s2 + $0x38c] sm:$0xf]
    %v391 = vld [vmem:[%s2 + $0x390] sm:$0xf]
    %v392 = vld [vmem:[%s2 + $0x394] sm:$0xf]
    %v393 = vld [vmem:[%s2 + $0x398] sm:$0xf]
    %v394 = vld [vmem:[%s2 + $0x39c] sm:$0xf]
    %v395 = vld [vmem:[%s2 + $0x3a0] sm:$0xf]
    %v396 = vld [vmem:[%s2 + $0x3a4] sm:$0xf]
    %v397 = vld [vmem:[%s2 + $0x3a8] sm:$0xf]
    %v398 = vld [vmem:[%s2 + $0x3ac] sm:$0xf]
    %v399 = vld [vmem:[%s2 + $0x3b0] sm:$0xf]
    %v400 = vld [vmem:[%s2 + $0x3b4] sm:$0xf]
    %v401 = vld [vmem:[%s2 + $0x3b8] sm:$0xf]
    %v402 = vld [vmem:[%s2 + $0x3bc] sm:$0xf]
    %v403 = vld [vmem:[%s2 + $0x3c0] sm:$0xf]
    %v404 = vld [vmem:[%s2 + $0x3c4] sm:$0xf]
    %v405 = vld [vmem:[%s2 + $0x3c8] sm:$0xf]
    %v406 = vld [vmem:[%s2 + $0x3cc] sm:$0xf]
    %v407 = vld [vmem:[%s2 + $0x3d0] sm:$0xf]
    %v408 = vld [vmem:[%s2 + $0x3d4] sm:$0xf]
    %v409 = vld [vmem:[%s2 + $0x3d8] sm:$0xf]
    %v410 = vld [vmem:[%s2 + $0x3dc] sm:$0xf]
    %v411 = vld [vmem:[%s2 + $0x3e0] sm:$0xf]
    %v412 = vld [vmem:[%s2 + $0x3e4] sm:$0xf]
    %v413 = vld [vmem:[%s2 + $0x3e8] sm:$0xf]
    %v414 = vld [vmem:[%s2 + $0x3ec] sm:$0xf]
    %v415 = vld [vmem:[%s2 + $0x3f0] sm:$0xf]
    %v416 = vld [vmem:[%s2 + $0x3f4] sm:$0xf]
    %v417 = vld [vmem:[%s2 + $0x3f8] sm:$0xf]
    %v418 = vld [vmem:[%s2 + $0x3fc] sm:$0xf]
    %v675 = vunpack.c.l.b16 %v163
    %v676 = vunpack.c.l.b16 %v164
    %v677 = vunpack.c.l.b16 %v165
    %v678 = vunpack.c.l.b16 %v166
    %v679 = vunpack.c.l.b16 %v167
    %v680 = vunpack.c.l.b16 %v168
    %v681 = vunpack.c.l.b16 %v169
    %v682 = vunpack.c.l.b16 %v170
    %v683 = vunpack.c.l.b16 %v171
    %v684 = vunpack.c.l.b16 %v172
    %v685 = vunpack.c.l.b16 %v173
    %v686 = vunpack.c.l.b16 %v174
    %v687 = vunpack.c.l.b16 %v175
    %v688 = vunpack.c.l.b16 %v176
    %v689 = vunpack.c.l.b16 %v177
    %v690 = vunpack.c.l.b16 %v178
    %v691 = vunpack.c.l.b16 %v179
    %v692 = vunpack.c.l.b16 %v180
    %v693 = vunpack.c.l.b16 %v181
    %v694 = vunpack.c.l.b16 %v182
    %v695 = vunpack.c.l.b16 %v183
    %v696 = vunpack.c.l.b16 %v184
    %v697 = vunpack.c.l.b16 %v185
    %v698 = vunpack.c.l.b16 %v186
    %v699 = vunpack.c.l.b16 %v187
    %v700 = vunpack.c.l.b16 %v188
    %v701 = vunpack.c.l.b16 %v189
    %v702 = vunpack.c.l.b16 %v190
    %v703 = vunpack.c.l.b16 %v191
    %v704 = vunpack.c.l.b16 %v192
    %v705 = vunpack.c.l.b16 %v193
    %v706 = vunpack.c.l.b16 %v194
    %v707 = vunpack.c.l.b16 %v195
    %v708 = vunpack.c.l.b16 %v196
    %v709 = vunpack.c.l.b16 %v197
    %v710 = vunpack.c.l.b16 %v198
    %v711 = vunpack.c.l.b16 %v199
    %v712 = vunpack.c.l.b16 %v200
    %v713 = vunpack.c.l.b16 %v201
    %v714 = vunpack.c.l.b16 %v202
    %v715 = vunpack.c.l.b16 %v203
    %v716 = vunpack.c.l.b16 %v204
    %v717 = vunpack.c.l.b16 %v205
    %v718 = vunpack.c.l.b16 %v206
    %v719 = vunpack.c.l.b16 %v207
    %v720 = vunpack.c.l.b16 %v208
    %v721 = vunpack.c.l.b16 %v209
    %v722 = vunpack.c.l.b16 %v210
    %v723 = vunpack.c.l.b16 %v211
    %v724 = vunpack.c.l.b16 %v212
    %v725 = vunpack.c.l.b16 %v213
    %v726 = vunpack.c.l.b16 %v214
    %v727 = vunpack.c.l.b16 %v215
    %v728 = vunpack.c.l.b16 %v216
    %v729 = vunpack.c.l.b16 %v217
    %v730 = vunpack.c.l.b16 %v218
    %v731 = vunpack.c.l.b16 %v219
    %v732 = vunpack.c.l.b16 %v220
    %v733 = vunpack.c.l.b16 %v221
    %v734 = vunpack.c.l.b16 %v222
    %v735 = vunpack.c.l.b16 %v223
    %v736 = vunpack.c.l.b16 %v224
    %v737 = vunpack.c.l.b16 %v225
    %v738 = vunpack.c.l.b16 %v226
    %v739 = vunpack.c.l.b16 %v227
    %v740 = vunpack.c.l.b16 %v228
    %v741 = vunpack.c.l.b16 %v229
    %v742 = vunpack.c.l.b16 %v230
    %v743 = vunpack.c.l.b16 %v231
    %v744 = vunpack.c.l.b16 %v232
    %v745 = vunpack.c.l.b16 %v233
    %v746 = vunpack.c.l.b16 %v234
    %v747 = vunpack.c.l.b16 %v235
    %v748 = vunpack.c.l.b16 %v236
    %v749 = vunpack.c.l.b16 %v237
    %v750 = vunpack.c.l.b16 %v238
    %v751 = vunpack.c.l.b16 %v239
    %v752 = vunpack.c.l.b16 %v240
    %v753 = vunpack.c.l.b16 %v241
    %v754 = vunpack.c.l.b16 %v242
    %v755 = vunpack.c.l.b16 %v243
    %v756 = vunpack.c.l.b16 %v244
    %v757 = vunpack.c.l.b16 %v245
    %v758 = vunpack.c.l.b16 %v246
    %v759 = vunpack.c.l.b16 %v247
    %v760 = vunpack.c.l.b16 %v248
    %v761 = vunpack.c.l.b16 %v249
    %v762 = vunpack.c.l.b16 %v250
    %v763 = vunpack.c.l.b16 %v251
    %v764 = vunpack.c.l.b16 %v252
    %v765 = vunpack.c.l.b16 %v253
    %v766 = vunpack.c.l.b16 %v254
    %v767 = vunpack.c.l.b16 %v255
    %v768 = vunpack.c.l.b16 %v256
    %v769 = vunpack.c.l.b16 %v257
    %v770 = vunpack.c.l.b16 %v258
    %v771 = vunpack.c.l.b16 %v259
    %v772 = vunpack.c.l.b16 %v260
    %v773 = vunpack.c.l.b16 %v261
    %v774 = vunpack.c.l.b16 %v262
    %v775 = vunpack.c.l.b16 %v263
    %v776 = vunpack.c.l.b16 %v264
    %v777 = vunpack.c.l.b16 %v265
    %v778 = vunpack.c.l.b16 %v266
    %v779 = vunpack.c.l.b16 %v267
    %v780 = vunpack.c.l.b16 %v268
    %v781 = vunpack.c.l.b16 %v269
    %v782 = vunpack.c.l.b16 %v270
    %v783 = vunpack.c.l.b16 %v271
    %v784 = vunpack.c.l.b16 %v272
    %v785 = vunpack.c.l.b16 %v273
    %v786 = vunpack.c.l.b16 %v274
    %v787 = vunpack.c.l.b16 %v275
    %v788 = vunpack.c.l.b16 %v276
    %v789 = vunpack.c.l.b16 %v277
    %v790 = vunpack.c.l.b16 %v278
    %v791 = vunpack.c.l.b16 %v279
    %v792 = vunpack.c.l.b16 %v280
    %v793 = vunpack.c.l.b16 %v281
    %v794 = vunpack.c.l.b16 %v282
    %v795 = vunpack.c.l.b16 %v283
    %v796 = vunpack.c.l.b16 %v284
    %v797 = vunpack.c.l.b16 %v285
    %v798 = vunpack.c.l.b16 %v286
    %v799 = vunpack.c.l.b16 %v287
    %v800 = vunpack.c.l.b16 %v288
    %v801 = vunpack.c.l.b16 %v289
    %v802 = vunpack.c.l.b16 %v290
    %v803 = vunpack.c.l.b16 %v291
    %v804 = vunpack.c.l.b16 %v292
    %v805 = vunpack.c.l.b16 %v293
    %v806 = vunpack.c.l.b16 %v294
    %v807 = vunpack.c.l.b16 %v295
    %v808 = vunpack.c.l.b16 %v296
    %v809 = vunpack.c.l.b16 %v297
    %v810 = vunpack.c.l.b16 %v298
    %v811 = vunpack.c.l.b16 %v299
    %v812 = vunpack.c.l.b16 %v300
    %v813 = vunpack.c.l.b16 %v301
    %v814 = vunpack.c.l.b16 %v302
    %v815 = vunpack.c.l.b16 %v303
    %v816 = vunpack.c.l.b16 %v304
    %v817 = vunpack.c.l.b16 %v305
    %v818 = vunpack.c.l.b16 %v306
    %v819 = vunpack.c.l.b16 %v307
    %v820 = vunpack.c.l.b16 %v308
    %v821 = vunpack.c.l.b16 %v309
    %v822 = vunpack.c.l.b16 %v310
    %v823 = vunpack.c.l.b16 %v311
    %v824 = vunpack.c.l.b16 %v312
    %v825 = vunpack.c.l.b16 %v313
    %v826 = vunpack.c.l.b16 %v314
    %v827 = vunpack.c.l.b16 %v315
    %v828 = vunpack.c.l.b16 %v316
    %v829 = vunpack.c.l.b16 %v317
    %v830 = vunpack.c.l.b16 %v318
    %v831 = vunpack.c.l.b16 %v319
    %v832 = vunpack.c.l.b16 %v320
    %v833 = vunpack.c.l.b16 %v321
    %v834 = vunpack.c.l.b16 %v322
    %v835 = vunpack.c.l.b16 %v323
    %v836 = vunpack.c.l.b16 %v324
    %v837 = vunpack.c.l.b16 %v325
    %v838 = vunpack.c.l.b16 %v326
    %v839 = vunpack.c.l.b16 %v327
    %v840 = vunpack.c.l.b16 %v328
    %v841 = vunpack.c.l.b16 %v329
    %v842 = vunpack.c.l.b16 %v330
    %v843 = vunpack.c.l.b16 %v331
    %v844 = vunpack.c.l.b16 %v332
    %v845 = vunpack.c.l.b16 %v333
    %v846 = vunpack.c.l.b16 %v334
    %v847 = vunpack.c.l.b16 %v335
    %v848 = vunpack.c.l.b16 %v336
    %v849 = vunpack.c.l.b16 %v337
    %v850 = vunpack.c.l.b16 %v338
    %v851 = vunpack.c.l.b16 %v339
    %v852 = vunpack.c.l.b16 %v340
    %v853 = vunpack.c.l.b16 %v341
    %v854 = vunpack.c.l.b16 %v342
    %v855 = vunpack.c.l.b16 %v343
    %v856 = vunpack.c.l.b16 %v344
    %v857 = vunpack.c.l.b16 %v345
    %v858 = vunpack.c.l.b16 %v346
    %v859 = vunpack.c.l.b16 %v347
    %v860 = vunpack.c.l.b16 %v348
    %v861 = vunpack.c.l.b16 %v349
    %v862 = vunpack.c.l.b16 %v350
    %v863 = vunpack.c.l.b16 %v351
    %v864 = vunpack.c.l.b16 %v352
    %v865 = vunpack.c.l.b16 %v353
    %v866 = vunpack.c.l.b16 %v354
    %v867 = vunpack.c.l.b16 %v355
    %v868 = vunpack.c.l.b16 %v356
    %v869 = vunpack.c.l.b16 %v357
    %v870 = vunpack.c.l.b16 %v358
    %v871 = vunpack.c.l.b16 %v359
    %v872 = vunpack.c.l.b16 %v360
    %v873 = vunpack.c.l.b16 %v361
    %v874 = vunpack.c.l.b16 %v362
    %v875 = vunpack.c.l.b16 %v363
    %v876 = vunpack.c.l.b16 %v364
    %v877 = vunpack.c.l.b16 %v365
    %v878 = vunpack.c.l.b16 %v366
    %v879 = vunpack.c.l.b16 %v367
    %v880 = vunpack.c.l.b16 %v368
    %v881 = vunpack.c.l.b16 %v369
    %v882 = vunpack.c.l.b16 %v370
    %v883 = vunpack.c.l.b16 %v371
    %v884 = vunpack.c.l.b16 %v372
    %v885 = vunpack.c.l.b16 %v373
    %v886 = vunpack.c.l.b16 %v374
    %v887 = vunpack.c.l.b16 %v375
    %v888 = vunpack.c.l.b16 %v376
    %v889 = vunpack.c.l.b16 %v377
    %v890 = vunpack.c.l.b16 %v378
    %v891 = vunpack.c.l.b16 %v379
    %v892 = vunpack.c.l.b16 %v380
    %v893 = vunpack.c.l.b16 %v381
    %v894 = vunpack.c.l.b16 %v382
    %v895 = vunpack.c.l.b16 %v383
    %v896 = vunpack.c.l.b16 %v384
    %v897 = vunpack.c.l.b16 %v385
    %v898 = vunpack.c.l.b16 %v386
    %v899 = vunpack.c.l.b16 %v387
    %v900 = vunpack.c.l.b16 %v388
    %v901 = vunpack.c.l.b16 %v389
    %v902 = vunpack.c.l.b16 %v390
    %v903 = vunpack.c.l.b16 %v391
    %v904 = vunpack.c.l.b16 %v392
    %v905 = vunpack.c.l.b16 %v393
    %v906 = vunpack.c.l.b16 %v394
    %v907 = vunpack.c.l.b16 %v395
    %v908 = vunpack.c.l.b16 %v396
    %v909 = vunpack.c.l.b16 %v397
    %v910 = vunpack.c.l.b16 %v398
    %v911 = vunpack.c.l.b16 %v399
    %v912 = vunpack.c.l.b16 %v400
    %v913 = vunpack.c.l.b16 %v401
    %v914 = vunpack.c.l.b16 %v402
    %v915 = vunpack.c.l.b16 %v403
    %v916 = vunpack.c.l.b16 %v404
    %v917 = vunpack.c.l.b16 %v405
    %v918 = vunpack.c.l.b16 %v406
    %v919 = vunpack.c.l.b16 %v407
    %v920 = vunpack.c.l.b16 %v408
    %v921 = vunpack.c.l.b16 %v409
    %v922 = vunpack.c.l.b16 %v410
    %v923 = vunpack.c.l.b16 %v411
    %v924 = vunpack.c.l.b16 %v412
    %v925 = vunpack.c.l.b16 %v413
    %v926 = vunpack.c.l.b16 %v414
    %v927 = vunpack.c.l.b16 %v415
    %v928 = vunpack.c.l.b16 %v416
    %v929 = vunpack.c.l.b16 %v417
    %v930 = vunpack.c.l.b16 %v418
    %v931 = vpack.c.b16 %v676, %v675
    %v932 = vpack.c.b16 %v678, %v677
    %v933 = vpack.c.b16 %v680, %v679
    %v934 = vpack.c.b16 %v682, %v681
    %v935 = vpack.c.b16 %v684, %v683
    %v936 = vpack.c.b16 %v686, %v685
    %v937 = vpack.c.b16 %v688, %v687
    %v938 = vpack.c.b16 %v690, %v689
    %v939 = vpack.c.b16 %v692, %v691
    %v940 = vpack.c.b16 %v694, %v693
    %v941 = vpack.c.b16 %v696, %v695
    %v942 = vpack.c.b16 %v698, %v697
    %v943 = vpack.c.b16 %v700, %v699
    %v944 = vpack.c.b16 %v702, %v701
    %v945 = vpack.c.b16 %v704, %v703
    %v946 = vpack.c.b16 %v706, %v705
    %v947 = vpack.c.b16 %v708, %v707
    %v948 = vpack.c.b16 %v710, %v709
    %v949 = vpack.c.b16 %v712, %v711
    %v950 = vpack.c.b16 %v714, %v713
    %v951 = vpack.c.b16 %v716, %v715
    %v952 = vpack.c.b16 %v718, %v717
    %v953 = vpack.c.b16 %v720, %v719
    %v954 = vpack.c.b16 %v722, %v721
    %v955 = vpack.c.b16 %v724, %v723
    %v956 = vpack.c.b16 %v726, %v725
    %v957 = vpack.c.b16 %v728, %v727
    %v958 = vpack.c.b16 %v730, %v729
    %v959 = vpack.c.b16 %v732, %v731
    %v960 = vpack.c.b16 %v734, %v733
    %v961 = vpack.c.b16 %v736, %v735
    %v962 = vpack.c.b16 %v738, %v737
    %v963 = vpack.c.b16 %v740, %v739
    %v964 = vpack.c.b16 %v742, %v741
    %v965 = vpack.c.b16 %v744, %v743
    %v966 = vpack.c.b16 %v746, %v745
    %v967 = vpack.c.b16 %v748, %v747
    %v968 = vpack.c.b16 %v750, %v749
    %v969 = vpack.c.b16 %v752, %v751
    %v970 = vpack.c.b16 %v754, %v753
    %v971 = vpack.c.b16 %v756, %v755
    %v972 = vpack.c.b16 %v758, %v757
    %v973 = vpack.c.b16 %v760, %v759
    %v974 = vpack.c.b16 %v762, %v761
    %v975 = vpack.c.b16 %v764, %v763
    %v976 = vpack.c.b16 %v766, %v765
    %v977 = vpack.c.b16 %v768, %v767
    %v978 = vpack.c.b16 %v770, %v769
    %v979 = vpack.c.b16 %v772, %v771
    %v980 = vpack.c.b16 %v774, %v773
    %v981 = vpack.c.b16 %v776, %v775
    %v982 = vpack.c.b16 %v778, %v777
    %v983 = vpack.c.b16 %v780, %v779
    %v984 = vpack.c.b16 %v782, %v781
    %v985 = vpack.c.b16 %v784, %v783
    %v986 = vpack.c.b16 %v786, %v785
    %v987 = vpack.c.b16 %v788, %v787
    %v988 = vpack.c.b16 %v790, %v789
    %v989 = vpack.c.b16 %v792, %v791
    %v990 = vpack.c.b16 %v794, %v793
    %v991 = vpack.c.b16 %v796, %v795
    %v992 = vpack.c.b16 %v798, %v797
    %v993 = vpack.c.b16 %v800, %v799
    %v994 = vpack.c.b16 %v802, %v801
    %v995 = vpack.c.b16 %v804, %v803
    %v996 = vpack.c.b16 %v806, %v805
    %v997 = vpack.c.b16 %v808, %v807
    %v998 = vpack.c.b16 %v810, %v809
    %v999 = vpack.c.b16 %v812, %v811
    %v1000 = vpack.c.b16 %v814, %v813
    %v1001 = vpack.c.b16 %v816, %v815
    %v1002 = vpack.c.b16 %v818, %v817
    %v1003 = vpack.c.b16 %v820, %v819
    %v1004 = vpack.c.b16 %v822, %v821
    %v1005 = vpack.c.b16 %v824, %v823
    %v1006 = vpack.c.b16 %v826, %v825
    %v1007 = vpack.c.b16 %v828, %v827
    %v1008 = vpack.c.b16 %v830, %v829
    %v1009 = vpack.c.b16 %v832, %v831
    %v1010 = vpack.c.b16 %v834, %v833
    %v1011 = vpack.c.b16 %v836, %v835
    %v1012 = vpack.c.b16 %v838, %v837
    %v1013 = vpack.c.b16 %v840, %v839
    %v1014 = vpack.c.b16 %v842, %v841
    %v1015 = vpack.c.b16 %v844, %v843
    %v1016 = vpack.c.b16 %v846, %v845
    %v1017 = vpack.c.b16 %v848, %v847
    %v1018 = vpack.c.b16 %v850, %v849
    %v1019 = vpack.c.b16 %v852, %v851
    %v1020 = vpack.c.b16 %v854, %v853
    %v1021 = vpack.c.b16 %v856, %v855
    %v1022 = vpack.c.b16 %v858, %v857
    %v1023 = vpack.c.b16 %v860, %v859
    %v1024 = vpack.c.b16 %v862, %v861
    %v1025 = vpack.c.b16 %v864, %v863
    %v1026 = vpack.c.b16 %v866, %v865
    %v1027 = vpack.c.b16 %v868, %v867
    %v1028 = vpack.c.b16 %v870, %v869
    %v1029 = vpack.c.b16 %v872, %v871
    %v1030 = vpack.c.b16 %v874, %v873
    %v1031 = vpack.c.b16 %v876, %v875
    %v1032 = vpack.c.b16 %v878, %v877
    %v1033 = vpack.c.b16 %v880, %v879
    %v1034 = vpack.c.b16 %v882, %v881
    %v1035 = vpack.c.b16 %v884, %v883
    %v1036 = vpack.c.b16 %v886, %v885
    %v1037 = vpack.c.b16 %v888, %v887
    %v1038 = vpack.c.b16 %v890, %v889
    %v1039 = vpack.c.b16 %v892, %v891
    %v1040 = vpack.c.b16 %v894, %v893
    %v1041 = vpack.c.b16 %v896, %v895
    %v1042 = vpack.c.b16 %v898, %v897
    %v1043 = vpack.c.b16 %v900, %v899
    %v1044 = vpack.c.b16 %v902, %v901
    %v1045 = vpack.c.b16 %v904, %v903
    %v1046 = vpack.c.b16 %v906, %v905
    %v1047 = vpack.c.b16 %v908, %v907
    %v1048 = vpack.c.b16 %v910, %v909
    %v1049 = vpack.c.b16 %v912, %v911
    %v1050 = vpack.c.b16 %v914, %v913
    %v1051 = vpack.c.b16 %v916, %v915
    %v1052 = vpack.c.b16 %v918, %v917
    %v1053 = vpack.c.b16 %v920, %v919
    %v1054 = vpack.c.b16 %v922, %v921
    %v1055 = vpack.c.b16 %v924, %v923
    %v1056 = vpack.c.b16 %v926, %v925
    %v1057 = vpack.c.b16 %v928, %v927
    %v1058 = vpack.c.b16 %v930, %v929
    %1187 = vmatprep.subr.bf16.mxu0 0
    %1188 = vmatpush1.bf16.msra.mxu0 %v931
    %1189 = vmatprep.subr.bf16.mxu0 0
    %1190 = vmatpush1.bf16.msra.mxu0 %v932
    %1191 = vmatprep.subr.bf16.mxu0 0
    %1192 = vmatpush1.bf16.msra.mxu0 %v933
    %1193 = vmatprep.subr.bf16.mxu0 0
    %1194 = vmatpush1.bf16.msra.mxu0 %v934
    %1195 = vmatprep.subr.bf16.mxu0 0
    %1196 = vmatpush1.bf16.msra.mxu0 %v935
    %1197 = vmatprep.subr.bf16.mxu0 0
    %1198 = vmatpush1.bf16.msra.mxu0 %v936
    %1199 = vmatprep.subr.bf16.mxu0 0
    %1200 = vmatpush1.bf16.msra.mxu0 %v937
    %1201 = vmatprep.subr.bf16.mxu0 0
    %1202 = vmatpush1.bf16.msra.mxu0 %v938
    %1203 = vmatprep.subr.bf16.mxu0 0
    %1204 = vmatpush1.bf16.msra.mxu0 %v939
    %1205 = vmatprep.subr.bf16.mxu0 0
    %1206 = vmatpush1.bf16.msra.mxu0 %v940
    %1207 = vmatprep.subr.bf16.mxu0 0
    %1208 = vmatpush1.bf16.msra.mxu0 %v941
    %1209 = vmatprep.subr.bf16.mxu0 0
    %1210 = vmatpush1.bf16.msra.mxu0 %v942
    %1211 = vmatprep.subr.bf16.mxu0 0
    %1212 = vmatpush1.bf16.msra.mxu0 %v943
    %1213 = vmatprep.subr.bf16.mxu0 0
    %1214 = vmatpush1.bf16.msra.mxu0 %v944
    %1215 = vmatprep.subr.bf16.mxu0 0
    %1216 = vmatpush1.bf16.msra.mxu0 %v945
    %1217 = vmatprep.subr.bf16.mxu0 0
    %1218 = vmatpush1.bf16.msra.mxu0 %v946
    %1219 = vmatprep.mubr.bf16.mxu0 %v148
    %1220 = vmatmul.mubr.bf16.gmra.mrb[0].mxu0 %v147
    %v1221 = vpop.f32.mrb[0].mxu0
    %v1222 = vadd.f32 0.0, %v1221
    %v1223 = vpop.f32.mrb[0].mxu0
    %v1224 = vpop.f32.mrb[0].mxu0
    %v1225 = vpop.f32.mrb[0].mxu0
    %1226 = vdwg.mxu0
    %1227 = vmatprep.subr.bf16.mxu0 0
    %1228 = vmatpush1.bf16.msra.mxu0 %v947
    %1229 = vmatprep.subr.bf16.mxu0 0
    %1230 = vmatpush1.bf16.msra.mxu0 %v948
    %1231 = vmatprep.subr.bf16.mxu0 0
    %1232 = vmatpush1.bf16.msra.mxu0 %v949
    %1233 = vmatprep.subr.bf16.mxu0 0
    %1234 = vmatpush1.bf16.msra.mxu0 %v950
    %1235 = vmatprep.subr.bf16.mxu0 0
    %1236 = vmatpush1.bf16.msra.mxu0 %v951
    %1237 = vmatprep.subr.bf16.mxu0 0
    %1238 = vmatpush1.bf16.msra.mxu0 %v952
    %1239 = vmatprep.subr.bf16.mxu0 0
    %1240 = vmatpush1.bf16.msra.mxu0 %v953
    %1241 = vmatprep.subr.bf16.mxu0 0
    %1242 = vmatpush1.bf16.msra.mxu0 %v954
    %1243 = vmatprep.subr.bf16.mxu0 0
    %1244 = vmatpush1.bf16.msra.mxu0 %v955
    %1245 = vmatprep.subr.bf16.mxu0 0
    %1246 = vmatpush1.bf16.msra.mxu0 %v956
    %1247 = vmatprep.subr.bf16.mxu0 0
    %1248 = vmatpush1.bf16.msra.mxu0 %v957
    %1249 = vmatprep.subr.bf16.mxu0 0
    %1250 = vmatpush1.bf16.msra.mxu0 %v958
    %1251 = vmatprep.subr.bf16.mxu0 0
    %1252 = vmatpush1.bf16.msra.mxu0 %v959
    %1253 = vmatprep.subr.bf16.mxu0 0
    %1254 = vmatpush1.bf16.msra.mxu0 %v960
    %1255 = vmatprep.subr.bf16.mxu0 0
    %1256 = vmatpush1.bf16.msra.mxu0 %v961
    %1257 = vmatprep.subr.bf16.mxu0 0
    %1258 = vmatpush1.bf16.msra.mxu0 %v962
    %1259 = vmatprep.mubr.bf16.mxu0 %v150
    %1260 = vmatmul.mubr.bf16.gmra.mrb[0].mxu0 %v149
    %v1261 = vpop.f32.mrb[0].mxu0
    %v1262 = vadd.f32 %v1222, %v1261
    %v1263 = vpop.f32.mrb[0].mxu0
    %v1264 = vpop.f32.mrb[0].mxu0
    %v1265 = vpop.f32.mrb[0].mxu0
    %1266 = vdwg.mxu0
    %1267 = vmatprep.subr.bf16.mxu0 0
    %1268 = vmatpush1.bf16.msra.mxu0 %v963
    %1269 = vmatprep.subr.bf16.mxu0 0
    %1270 = vmatpush1.bf16.msra.mxu0 %v964
    %1271 = vmatprep.subr.bf16.mxu0 0
    %1272 = vmatpush1.bf16.msra.mxu0 %v965
    %1273 = vmatprep.subr.bf16.mxu0 0
    %1274 = vmatpush1.bf16.msra.mxu0 %v966
    %1275 = vmatprep.subr.bf16.mxu0 0
    %1276 = vmatpush1.bf16.msra.mxu0 %v967
    %1277 = vmatprep.subr.bf16.mxu0 0
    %1278 = vmatpush1.bf16.msra.mxu0 %v968
    %1279 = vmatprep.subr.bf16.mxu0 0
    %1280 = vmatpush1.bf16.msra.mxu0 %v969
    %1281 = vmatprep.subr.bf16.mxu0 0
    %1282 = vmatpush1.bf16.msra.mxu0 %v970
    %1283 = vmatprep.subr.bf16.mxu0 0
    %1284 = vmatpush1.bf16.msra.mxu0 %v971
    %1285 = vmatprep.subr.bf16.mxu0 0
    %1286 = vmatpush1.bf16.msra.mxu0 %v972
    %1287 = vmatprep.subr.bf16.mxu0 0
    %1288 = vmatpush1.bf16.msra.mxu0 %v973
    %1289 = vmatprep.subr.bf16.mxu0 0
    %1290 = vmatpush1.bf16.msra.mxu0 %v974
    %1291 = vmatprep.subr.bf16.mxu0 0
    %1292 = vmatpush1.bf16.msra.mxu0 %v975
    %1293 = vmatprep.subr.bf16.mxu0 0
    %1294 = vmatpush1.bf16.msra.mxu0 %v976
    %1295 = vmatprep.subr.bf16.mxu0 0
    %1296 = vmatpush1.bf16.msra.mxu0 %v977
    %1297 = vmatprep.subr.bf16.mxu0 0
    %1298 = vmatpush1.bf16.msra.mxu0 %v978
    %1299 = vmatprep.mubr.bf16.mxu0 %v152
    %1300 = vmatmul.mubr.bf16.gmra.mrb[0].mxu0 %v151
    %v1301 = vpop.f32.mrb[0].mxu0
    %v1302 = vadd.f32 %v1262, %v1301
    %v1303 = vpop.f32.mrb[0].mxu0
    %v1304 = vpop.f32.mrb[0].mxu0
    %v1305 = vpop.f32.mrb[0].mxu0
    %1306 = vdwg.mxu0
    %1307 = vmatprep.subr.bf16.mxu0 0
    %1308 = vmatpush1.bf16.msra.mxu0 %v979
    %1309 = vmatprep.subr.bf16.mxu0 0
    %1310 = vmatpush1.bf16.msra.mxu0 %v980
    %1311 = vmatprep.subr.bf16.mxu0 0
    %1312 = vmatpush1.bf16.msra.mxu0 %v981
    %1313 = vmatprep.subr.bf16.mxu0 0
    %1314 = vmatpush1.bf16.msra.mxu0 %v982
    %1315 = vmatprep.subr.bf16.mxu0 0
    %1316 = vmatpush1.bf16.msra.mxu0 %v983
    %1317 = vmatprep.subr.bf16.mxu0 0
    %1318 = vmatpush1.bf16.msra.mxu0 %v984
    %1319 = vmatprep.subr.bf16.mxu0 0
    %1320 = vmatpush1.bf16.msra.mxu0 %v985
    %1321 = vmatprep.subr.bf16.mxu0 0
    %1322 = vmatpush1.bf16.msra.mxu0 %v986
    %1323 = vmatprep.subr.bf16.mxu0 0
    %1324 = vmatpush1.bf16.msra.mxu0 %v987
    %1325 = vmatprep.subr.bf16.mxu0 0
    %1326 = vmatpush1.bf16.msra.mxu0 %v988
    %1327 = vmatprep.subr.bf16.mxu0 0
    %1328 = vmatpush1.bf16.msra.mxu0 %v989
    %1329 = vmatprep.subr.bf16.mxu0 0
    %1330 = vmatpush1.bf16.msra.mxu0 %v990
    %1331 = vmatprep.subr.bf16.mxu0 0
    %1332 = vmatpush1.bf16.msra.mxu0 %v991
    %1333 = vmatprep.subr.bf16.mxu0 0
    %1334 = vmatpush1.bf16.msra.mxu0 %v992
    %1335 = vmatprep.subr.bf16.mxu0 0
    %1336 = vmatpush1.bf16.msra.mxu0 %v993
    %1337 = vmatprep.subr.bf16.mxu0 0
    %1338 = vmatpush1.bf16.msra.mxu0 %v994
    %1339 = vmatprep.mubr.bf16.mxu0 %v154
    %1340 = vmatmul.mubr.bf16.gmra.mrb[0].mxu0 %v153
    %v1341 = vpop.f32.mrb[0].mxu0
    %v1342 = vadd.f32 %v1302, %v1341
    %v1343 = vpop.f32.mrb[0].mxu0
    %v1344 = vpop.f32.mrb[0].mxu0
    %v1345 = vpop.f32.mrb[0].mxu0
    %1346 = vdwg.mxu0
    %1347 = vmatprep.subr.bf16.mxu0 0
    %1348 = vmatpush1.bf16.msra.mxu0 %v995
    %1349 = vmatprep.subr.bf16.mxu0 0
    %1350 = vmatpush1.bf16.msra.mxu0 %v996
    %1351 = vmatprep.subr.bf16.mxu0 0
    %1352 = vmatpush1.bf16.msra.mxu0 %v997
    %1353 = vmatprep.subr.bf16.mxu0 0
    %1354 = vmatpush1.bf16.msra.mxu0 %v998
    %1355 = vmatprep.subr.bf16.mxu0 0
    %1356 = vmatpush1.bf16.msra.mxu0 %v999
    %1357 = vmatprep.subr.bf16.mxu0 0
    %1358 = vmatpush1.bf16.msra.mxu0 %v1000
    %1359 = vmatprep.subr.bf16.mxu0 0
    %1360 = vmatpush1.bf16.msra.mxu0 %v1001
    %1361 = vmatprep.subr.bf16.mxu0 0
    %1362 = vmatpush1.bf16.msra.mxu0 %v1002
    %1363 = vmatprep.subr.bf16.mxu0 0
    %1364 = vmatpush1.bf16.msra.mxu0 %v1003
    %1365 = vmatprep.subr.bf16.mxu0 0
    %1366 = vmatpush1.bf16.msra.mxu0 %v1004
    %1367 = vmatprep.subr.bf16.mxu0 0
    %1368 = vmatpush1.bf16.msra.mxu0 %v1005
    %1369 = vmatprep.subr.bf16.mxu0 0
    %1370 = vmatpush1.bf16.msra.mxu0 %v1006
    %1371 = vmatprep.subr.bf16.mxu0 0
    %1372 = vmatpush1.bf16.msra.mxu0 %v1007
    %1373 = vmatprep.subr.bf16.mxu0 0
    %1374 = vmatpush1.bf16.msra.mxu0 %v1008
    %1375 = vmatprep.subr.bf16.mxu0 0
    %1376 = vmatpush1.bf16.msra.mxu0 %v1009
    %1377 = vmatprep.subr.bf16.mxu0 0
    %1378 = vmatpush1.bf16.msra.mxu0 %v1010
    %1379 = vmatprep.mubr.bf16.mxu0 %v156
    %1380 = vmatmul.mubr.bf16.gmra.mrb[0].mxu0 %v155
    %v1381 = vpop.f32.mrb[0].mxu0
    %v1382 = vadd.f32 %v1342, %v1381
    %v1383 = vpop.f32.mrb[0].mxu0
    %v1384 = vpop.f32.mrb[0].mxu0
    %v1385 = vpop.f32.mrb[0].mxu0
    %1386 = vdwg.mxu0
    %1387 = vmatprep.subr.bf16.mxu0 0
    %1388 = vmatpush1.bf16.msra.mxu0 %v1011
    %1389 = vmatprep.subr.bf16.mxu0 0
    %1390 = vmatpush1.bf16.msra.mxu0 %v1012
    %1391 = vmatprep.subr.bf16.mxu0 0
    %1392 = vmatpush1.bf16.msra.mxu0 %v1013
    %1393 = vmatprep.subr.bf16.mxu0 0
    %1394 = vmatpush1.bf16.msra.mxu0 %v1014
    %1395 = vmatprep.subr.bf16.mxu0 0
    %1396 = vmatpush1.bf16.msra.mxu0 %v1015
    %1397 = vmatprep.subr.bf16.mxu0 0
    %1398 = vmatpush1.bf16.msra.mxu0 %v1016
    %1399 = vmatprep.subr.bf16.mxu0 0
    %1400 = vmatpush1.bf16.msra.mxu0 %v1017
    %1401 = vmatprep.subr.bf16.mxu0 0
    %1402 = vmatpush1.bf16.msra.mxu0 %v1018
    %1403 = vmatprep.subr.bf16.mxu0 0
    %1404 = vmatpush1.bf16.msra.mxu0 %v1019
    %1405 = vmatprep.subr.bf16.mxu0 0
    %1406 = vmatpush1.bf16.msra.mxu0 %v1020
    %1407 = vmatprep.subr.bf16.mxu0 0
    %1408 = vmatpush1.bf16.msra.mxu0 %v1021
    %1409 = vmatprep.subr.bf16.mxu0 0
    %1410 = vmatpush1.bf16.msra.mxu0 %v1022
    %1411 = vmatprep.subr.bf16.mxu0 0
    %1412 = vmatpush1.bf16.msra.mxu0 %v1023
    %1413 = vmatprep.subr.bf16.mxu0 0
    %1414 = vmatpush1.bf16.msra.mxu0 %v1024
    %1415 = vmatprep.subr.bf16.mxu0 0
    %1416 = vmatpush1.bf16.msra.mxu0 %v1025
    %1417 = vmatprep.subr.bf16.mxu0 0
    %1418 = vmatpush1.bf16.msra.mxu0 %v1026
    %1419 = vmatprep.mubr.bf16.mxu0 %v158
    %1420 = vmatmul.mubr.bf16.gmra.mrb[0].mxu0 %v157
    %v1421 = vpop.f32.mrb[0].mxu0
    %v1422 = vadd.f32 %v1382, %v1421
    %v1423 = vpop.f32.mrb[0].mxu0
    %v1424 = vpop.f32.mrb[0].mxu0
    %v1425 = vpop.f32.mrb[0].mxu0
    %1426 = vdwg.mxu0
    %1427 = vmatprep.subr.bf16.mxu0 0
    %1428 = vmatpush1.bf16.msra.mxu0 %v1027
    %1429 = vmatprep.subr.bf16.mxu0 0
    %1430 = vmatpush1.bf16.msra.mxu0 %v1028
    %1431 = vmatprep.subr.bf16.mxu0 0
    %1432 = vmatpush1.bf16.msra.mxu0 %v1029
    %1433 = vmatprep.subr.bf16.mxu0 0
    %1434 = vmatpush1.bf16.msra.mxu0 %v1030
    %1435 = vmatprep.subr.bf16.mxu0 0
    %1436 = vmatpush1.bf16.msra.mxu0 %v1031
    %1437 = vmatprep.subr.bf16.mxu0 0
    %1438 = vmatpush1.bf16.msra.mxu0 %v1032
    %1439 = vmatprep.subr.bf16.mxu0 0
    %1440 = vmatpush1.bf16.msra.mxu0 %v1033
    %1441 = vmatprep.subr.bf16.mxu0 0
    %1442 = vmatpush1.bf16.msra.mxu0 %v1034
    %1443 = vmatprep.subr.bf16.mxu0 0
    %1444 = vmatpush1.bf16.msra.mxu0 %v1035
    %1445 = vmatprep.subr.bf16.mxu0 0
    %1446 = vmatpush1.bf16.msra.mxu0 %v1036
    %1447 = vmatprep.subr.bf16.mxu0 0
    %1448 = vmatpush1.bf16.msra.mxu0 %v1037
    %1449 = vmatprep.subr.bf16.mxu0 0
    %1450 = vmatpush1.bf16.msra.mxu0 %v1038
    %1451 = vmatprep.subr.bf16.mxu0 0
    %1452 = vmatpush1.bf16.msra.mxu0 %v1039
    %1453 = vmatprep.subr.bf16.mxu0 0
    %1454 = vmatpush1.bf16.msra.mxu0 %v1040
    %1455 = vmatprep.subr.bf16.mxu0 0
    %1456 = vmatpush1.bf16.msra.mxu0 %v1041
    %1457 = vmatprep.subr.bf16.mxu0 0
    %1458 = vmatpush1.bf16.msra.mxu0 %v1042
    %1459 = vmatprep.mubr.bf16.mxu0 %v160
    %1460 = vmatmul.mubr.bf16.gmra.mrb[0].mxu0 %v159
    %v1461 = vpop.f32.mrb[0].mxu0
    %v1462 = vadd.f32 %v1422, %v1461
    %v1463 = vpop.f32.mrb[0].mxu0
    %v1464 = vpop.f32.mrb[0].mxu0
    %v1465 = vpop.f32.mrb[0].mxu0
    %1466 = vdwg.mxu0
    %1467 = vmatprep.subr.bf16.mxu0 0
    %1468 = vmatpush1.bf16.msra.mxu0 %v1043
    %1469 = vmatprep.subr.bf16.mxu0 0
    %1470 = vmatpush1.bf16.msra.mxu0 %v1044
    %1471 = vmatprep.subr.bf16.mxu0 0
    %1472 = vmatpush1.bf16.msra.mxu0 %v1045
    %1473 = vmatprep.subr.bf16.mxu0 0
    %1474 = vmatpush1.bf16.msra.mxu0 %v1046
    %1475 = vmatprep.subr.bf16.mxu0 0
    %1476 = vmatpush1.bf16.msra.mxu0 %v1047
    %1477 = vmatprep.subr.bf16.mxu0 0
    %1478 = vmatpush1.bf16.msra.mxu0 %v1048
    %1479 = vmatprep.subr.bf16.mxu0 0
    %1480 = vmatpush1.bf16.msra.mxu0 %v1049
    %1481 = vmatprep.subr.bf16.mxu0 0
    %1482 = vmatpush1.bf16.msra.mxu0 %v1050
    %1483 = vmatprep.subr.bf16.mxu0 0
    %1484 = vmatpush1.bf16.msra.mxu0 %v1051
    %1485 = vmatprep.subr.bf16.mxu0 0
    %1486 = vmatpush1.bf16.msra.mxu0 %v1052
    %1487 = vmatprep.subr.bf16.mxu0 0
    %1488 = vmatpush1.bf16.msra.mxu0 %v1053
    %1489 = vmatprep.subr.bf16.mxu0 0
    %1490 = vmatpush1.bf16.msra.mxu0 %v1054
    %1491 = vmatprep.subr.bf16.mxu0 0
    %1492 = vmatpush1.bf16.msra.mxu0 %v1055
    %1493 = vmatprep.subr.bf16.mxu0 0
    %1494 = vmatpush1.bf16.msra.mxu0 %v1056
    %1495 = vmatprep.subr.bf16.mxu0 0
    %1496 = vmatpush1.bf16.msra.mxu0 %v1057
    %1497 = vmatprep.subr.bf16.mxu0 0
    %1498 = vmatpush1.bf16.msra.mxu0 %v1058
    %1499 = vmatprep.mubr.bf16.mxu0 %v162
    %1500 = vmatmul.mubr.bf16.gmra.mrb[0].mxu0 %v161
    %v1501 = vpop.f32.mrb[0].mxu0
    %v1502 = vadd.f32 %v1462, %v1501
    %v1503 = vpop.f32.mrb[0].mxu0
    %v1504 = vpop.f32.mrb[0].mxu0
    %v1505 = vpop.f32.mrb[0].mxu0
    %1506 = vdwg.mxu0
    %v1507 = vld [vmem:[%s3] sm:$0x1]
    %v1508 = vstv %s35
    %v1509 = vmul.f32 %v1508, %v1507
    %v1510 = vlaneseq
    %v1511 = vshrl.u32 %v1510, 7
    %v1512 = vsub.s32 0, %v1511
    %v1513 = vrot.slane %v1509, %v1512
    %v1514 = vmul.f32 %v1502, %v1513
    %v1515 = vld [vmem:[%s3 + $0x1] sm:$0x1]
    %v1516 = vlaneseq
    %v1517 = vshrl.u32 %v1516, 7
    %v1518 = vsub.s32 0, %v1517
    %v1519 = vrot.slane %v1515, %v1518
    %v1520 = vadd.f32 %v1514, %v1519
    %1521 = vst [vmem:[#allocation5] sm:$0x3] %v1520
    // Predicated region
    $region22: #{quant_model_forward.3} parent=1 // pred_check
      _
    $region23: #{quant_model_forward.3} parent=1 // pred_check_branch
      %1523 = sbr.rel (0) target = $region25
    $region24: #{quant_model_forward.3} parent=1 // pred_region
      %s1525 = ssub.s32 32, 32
      %1526 = vsyncadd [#allocation3], %s1525
      %s1528 = sshll.u32 [#allocation5], 4
      %s1529 = int_to_ptr.vmem [resolvable:$true] %s1528
      %1531 = dma.vmem_to_hbm [thread:$0]  %s1529, 32, %s4, [#allocation3]
    $region25: #{quant_model_forward.3} parent=1 // pred_fallthru
      _
    // Predicated region
    $region26: #{quant_model_forward.3} parent=1 // pred_check
      _
    $region27: #{quant_model_forward.3} parent=1 // pred_check_branch
      %1533 = sbr.rel (0) target = $region29
    $region28: #{quant_model_forward.3} parent=1 // pred_region
      %1534 = dma.done [#allocation3], 32
    $region29: #{quant_model_forward.3} parent=1 // pred_fallthru
      _
    %1535 = vsyncpa [#allocation3], 1
    %1536 = vsyncpa [#allocation4], 1

</llo_original>
